<compile_context>
chip_gen: v7x
topology: tpu7x:2x2x1
jax: 0.10.0
libtpu: 0.0.40
codegen_flags: <defaults>
</compile_context>

<pallas_src>
import functools

import jax
import jax.numpy as jnp
from jax import lax
from jax.experimental import pallas as pl
from jax.experimental.pallas import tpu as pltpu

# ---------------- config (small, consistent with a BERT-style encoder) -------------
MAX_LEN = 8
HIDDEN = 32
N_HEADS = 2
HEAD_DIM = HIDDEN // N_HEADS
FFN = 64
N_LAYERS = 2
VOCAB = 64
TYPE_VOCAB = 2
EPS_LN = 1e-12     # BERT layernorm eps
EPS_NORM = 1e-12   # F.normalize eps
ATTN_SCALE = 1.0 / float(HEAD_DIM) ** 0.5

# f32 parameter-slab row layout (width = 3*HIDDEN lanes)
P_WIDTH = 3 * HIDDEN
ROW_EMB_G = 0
ROW_EMB_B = 1
ROWS_PER_LAYER = 8      # bqkv, bo, ln1_g, ln1_b, b1, b2, ln2_g, ln2_b
P_ROWS = 2 + N_LAYERS * ROWS_PER_LAYER

# bf16 weight-slab lane layout per layer: [wq | wk | wv | wo | w1]
W_COLS = 3 * HIDDEN + HIDDEN + FFN   # 192


# ================================ fused Pallas kernel ===============================
def _layer_norm(x, g, b):
    mu = jnp.mean(x, axis=-1, keepdims=True)
    var = jnp.mean((x - mu) ** 2, axis=-1, keepdims=True)
    return (x - mu) * lax.rsqrt(var + EPS_LN) * g + b


def _encoder_kernel(emb_ref, bias_ref, w_ref, w2_ref, p_ref, out_ref, *, seq_len):
    f32, bf16 = jnp.float32, jnp.bfloat16
    L, H, dh = seq_len, HIDDEN, HEAD_DIM

    def pget(row, width):                       # (1, width) f32 slice of the param slab
        return p_ref[row:row + 1, 0:width]

    attn_bias = bias_ref[0]                     # (1, L) additive mask (0 / -1e9)

    # Embedding layernorm (no residual).
    x = _layer_norm(emb_ref[0].astype(f32), pget(ROW_EMB_G, H), pget(ROW_EMB_B, H))

    for l in range(N_LAYERS):
        base = 2 + l * ROWS_PER_LAYER
        x_bf = x.astype(bf16)

        # ---- fused QKV projection: one (L,H)x(H,3H) matmul + one bias add ----
        qkv = (jnp.dot(x_bf, w_ref[l, :, 0:3 * H], preferred_element_type=f32)
               + pget(base + 0, 3 * H))                                     # (L, 3H)

        # ---- per-head attention; ctx heads concatenated along lanes ----
        ctx_heads = []
        for h in range(N_HEADS):
            q_h = qkv[:, h * dh:(h + 1) * dh]
            k_h = qkv[:, H + h * dh:H + (h + 1) * dh]
            v_h = qkv[:, 2 * H + h * dh:2 * H + (h + 1) * dh]
            s = lax.dot_general(q_h.astype(bf16), k_h.astype(bf16),
                                (((1,), (1,)), ((), ())),
                                preferred_element_type=f32) * ATTN_SCALE    # (L, L)
            s = s + attn_bias
            s = s - jnp.max(s, axis=-1, keepdims=True)
            p = jnp.exp(s)
            p = p * pl.reciprocal(jnp.sum(p, axis=-1, keepdims=True), approx=True)
            ctx_heads.append(jnp.dot(p.astype(bf16), v_h.astype(bf16),
                                     preferred_element_type=f32))           # (L, dh)
        ctx = jnp.concatenate(ctx_heads, axis=-1)                           # (L, H)

        # ---- single output projection + residual + layernorm ----
        attn = (jnp.dot(ctx.astype(bf16), w_ref[l, :, 3 * H:4 * H],
                        preferred_element_type=f32) + pget(base + 1, H))
        x = _layer_norm(attn + x, pget(base + 2, H), pget(base + 3, H))

        # ---- fused FFN: dense + GELU + dense + residual + layernorm ----
        x_bf = x.astype(bf16)
        hmid = (jnp.dot(x_bf, w_ref[l, :, 4 * H:4 * H + FFN],
                        preferred_element_type=f32) + pget(base + 4, FFN))
        # TODO(synk): HF LaBSE/BERT uses exact erf-GELU; tanh approximation used here.
        hmid = jax.nn.gelu(hmid, approximate=True)
        ff = (jnp.dot(hmid.astype(bf16), w2_ref[l], preferred_element_type=f32)
              + pget(base + 5, H))
        x = _layer_norm(ff + x, pget(base + 6, H), pget(base + 7, H))

    # ---- pooling: VPU masked row-sum over tokens 1..L-2, then L2 normalize ----
    row_idx = lax.broadcasted_iota(jnp.int32, (L, H), 0)
    keep = (row_idx >= 1) & (row_idx <= L - 2)
    pooled = jnp.sum(jnp.where(keep, x, 0.0), axis=0, keepdims=True)        # (1, H)
    n2 = jnp.sum(pooled * pooled, axis=-1, keepdims=True)
    out_ref[0] = (pooled * lax.rsqrt(jnp.maximum(n2, EPS_NORM * EPS_NORM))
                  ).astype(out_ref.dtype)


def labse_encode(params, input_ids, token_type_ids, attention_mask):
    B, L = input_ids.shape
    # TODO(synk): tokenizer + pretrained embedding tables are glue; the gather runs in
    # XLA, everything downstream runs in one fused Pallas kernel.
    emb = (jnp.take(params["word_emb"], input_ids, axis=0)
           + jnp.take(params["type_emb"], token_type_ids, axis=0)
           + params["pos_emb"][None, :L, :])                                # (B, L, H)

    # additive attention bias, computed once host-side
    attn_bias = ((1.0 - attention_mask.astype(jnp.float32)) * (-1e9)).reshape(B, 1, L)

    w_slab, w2_slab, p_slab = params["w_slab"], params["w2_slab"], params["p_slab"]

    out = pl.pallas_call(
        functools.partial(_encoder_kernel, seq_len=L),
        out_shape=jax.ShapeDtypeStruct((B, 1, HIDDEN), jnp.float32),
        grid=(B,),
        in_specs=[
            pl.BlockSpec((1, L, HIDDEN), lambda b: (b, 0, 0)),
            pl.BlockSpec((1, 1, L), lambda b: (b, 0, 0)),
            pl.BlockSpec(w_slab.shape, lambda b: (0, 0, 0)),
            pl.BlockSpec(w2_slab.shape, lambda b: (0, 0, 0)),
            pl.BlockSpec(p_slab.shape, lambda b: (0, 0)),
        ],
        out_specs=pl.BlockSpec((1, 1, HIDDEN), lambda b: (b, 0, 0)),
        compiler_params=pltpu.CompilerParams(dimension_semantics=("parallel",)),
    )(emb, attn_bias, w_slab, w2_slab, p_slab)
    return out.reshape(B, HIDDEN)


# ============================ parameter construction ===============================
def init_params(key):
    def nrm(k, shape, scale=0.02):
        return (scale * jax.random.normal(k, shape)).astype(jnp.float32)

    keys = iter(jax.random.split(key, 3 + N_LAYERS * 6))
    params = {
        "word_emb": nrm(next(keys), (VOCAB, HIDDEN)),
        "type_emb": nrm(next(keys), (TYPE_VOCAB, HIDDEN)),
        "pos_emb": nrm(next(keys), (MAX_LEN, HIDDEN)),
    }

    # bf16 weight slab: per layer [wq | wk | wv | wo | w1] along lanes, w2 separate.
    w_rows, w2_rows = [], []
    for _ in range(N_LAYERS):
        wq = nrm(next(keys), (HIDDEN, HIDDEN))
        wk = nrm(next(keys), (HIDDEN, HIDDEN))
        wv = nrm(next(keys), (HIDDEN, HIDDEN))
        wo = nrm(next(keys), (HIDDEN, HIDDEN))
        w1 = nrm(next(keys), (HIDDEN, FFN))
        w2 = nrm(next(keys), (FFN, HIDDEN))
        w_rows.append(jnp.concatenate([wq, wk, wv, wo, w1], axis=1))   # (H, W_COLS)
        w2_rows.append(w2)                                             # (FFN, H)
    params["w_slab"] = jnp.stack(w_rows).astype(jnp.bfloat16)          # (Nl, H, 192)
    params["w2_slab"] = jnp.stack(w2_rows).astype(jnp.bfloat16)        # (Nl, FFN, H)

    # f32 bias / LayerNorm slab, one logical parameter per row (width P_WIDTH).
    def row(vals):
        r = jnp.zeros((P_WIDTH,), jnp.float32)
        return r.at[: vals.shape[0]].set(vals.astype(jnp.float32))

    rows = [row(jnp.ones((HIDDEN,))),        # emb_ln_g
            row(jnp.zeros((HIDDEN,)))]       # emb_ln_b
    for _ in range(N_LAYERS):
        rows.append(row(jnp.zeros((3 * HIDDEN,))))   # bqkv
        rows.append(row(jnp.zeros((HIDDEN,))))       # bo
        rows.append(row(jnp.ones((HIDDEN,))))        # ln1_g
        rows.append(row(jnp.zeros((HIDDEN,))))       # ln1_b
        rows.append(row(jnp.zeros((FFN,))))          # b1
        rows.append(row(jnp.zeros((HIDDEN,))))       # b2
        rows.append(row(jnp.ones((HIDDEN,))))        # ln2_g
        rows.append(row(jnp.zeros((HIDDEN,))))       # ln2_b
    params["p_slab"] = jnp.stack(rows)               # (P_ROWS, P_WIDTH)
    assert params["p_slab"].shape == (P_ROWS, P_WIDTH)
    return params


# ==================================== main ==========================================
if __name__ == "__main__":
    key = jax.random.PRNGKey(0)
    k_param, k_ids = jax.random.split(key)

    params = init_params(k_param)

    B = 2
    # synthetic "tokenized" batch: [CLS]=1 ... [SEP]=2, padded to MAX_LEN
    input_ids = jax.random.randint(k_ids, (B, MAX_LEN), 4, VOCAB, dtype=jnp.int32)
    input_ids = input_ids.at[:, 0].set(1)            # CLS
    input_ids = input_ids.at[:, MAX_LEN - 1].set(2)  # SEP
    attention_mask = jnp.ones((B, MAX_LEN), jnp.int32)
    # make second sentence shorter (2 pad tokens) to exercise the attention mask
    input_ids = input_ids.at[1, MAX_LEN - 3:].set(0)
    input_ids = input_ids.at[1, MAX_LEN - 4].set(2)
    attention_mask = attention_mask.at[1, MAX_LEN - 3:].set(0)
    token_type_ids = jnp.zeros((B, MAX_LEN), jnp.int32)

    out = jax.jit(labse_encode)(params, input_ids, token_type_ids, attention_mask)
    out = jax.block_until_ready(out)

    assert out.shape == (B, HIDDEN)
    assert bool(jnp.all(jnp.isfinite(out)))
    print("KERNEL_OK")
</pallas_src>

<mosaic_0001>
module attributes {stable_mosaic.version = 11 : i64} {
  func.func @_encoder_kernel(%arg0: i32, %arg1: memref<1x8x32xf32, #tpu.memory_space<vmem>>, %arg2: memref<1x1x8xf32, #tpu.memory_space<vmem>>, %arg3: memref<2x32x192xbf16, #tpu.memory_space<vmem>>, %arg4: memref<2x64x32xbf16, #tpu.memory_space<vmem>>, %arg5: memref<18x96xf32, #tpu.memory_space<vmem>>, %arg6: memref<1x1x32xf32, #tpu.memory_space<vmem>>) attributes {dimension_semantics = [#tpu.dimension_semantics<parallel>], iteration_bounds = array<i64: 2>, scalar_prefetch = 0 : i64, scratch_operands = 0 : i64, tpu.core_type = #tpu.core_type<tc>, window_params = [{transform_indices = @transform_0, window_bounds = array<i64: 1, 8, 32>}, {transform_indices = @transform_1, window_bounds = array<i64: 1, 1, 8>}, {pipeline_mode = #tpu.pipeline_mode<synchronous>, transform_indices = @transform_2, window_bounds = array<i64: 2, 32, 192>}, {pipeline_mode = #tpu.pipeline_mode<synchronous>, transform_indices = @transform_3, window_bounds = array<i64: 2, 64, 32>}, {pipeline_mode = #tpu.pipeline_mode<synchronous>, transform_indices = @transform_4, window_bounds = array<i64: 18, 96>}, {transform_indices = @transform_5, window_bounds = array<i64: 1, 1, 32>}]} {
    %c0 = arith.constant 0 : index
    %c0_0 = arith.constant 0 : index
    %c0_1 = arith.constant 0 : index
    %0 = vector.load %arg2[%c0, %c0_0, %c0_1] : memref<1x1x8xf32, #tpu.memory_space<vmem>>, vector<1x1x8xf32>
    %1 = vector.shape_cast %0 : vector<1x1x8xf32> to vector<1x8xf32>
    %c0_2 = arith.constant 0 : index
    %c0_3 = arith.constant 0 : index
    %c0_4 = arith.constant 0 : index
    %2 = vector.load %arg1[%c0_2, %c0_3, %c0_4] : memref<1x8x32xf32, #tpu.memory_space<vmem>>, vector<1x8x32xf32>
    %3 = vector.shape_cast %2 : vector<1x8x32xf32> to vector<8x32xf32>
    %c0_5 = arith.constant 0 : index
    %c0_6 = arith.constant 0 : index
    %4 = vector.load %arg5[%c0_5, %c0_6] : memref<18x96xf32, #tpu.memory_space<vmem>>, vector<1x32xf32>
    %c1 = arith.constant 1 : index
    %c0_7 = arith.constant 0 : index
    %5 = vector.load %arg5[%c1, %c0_7] : memref<18x96xf32, #tpu.memory_space<vmem>>, vector<1x32xf32>
    %cst = arith.constant dense<0.000000e+00> : vector<8xf32>
    %6 = vector.multi_reduction <add>, %3, %cst [1] : vector<8x32xf32> to vector<8xf32>
    %7 = vector.shape_cast %6 : vector<8xf32> to vector<8x1xf32>
    %cst_8 = arith.constant 3.200000e+01 : f32
    %8 = vector.broadcast %cst_8 : f32 to vector<8x1xf32>
    %9 = arith.divf %7, %8 : vector<8x1xf32>
    %10 = vector.broadcast %9 : vector<8x1xf32> to vector<8x32xf32>
    %11 = arith.subf %3, %10 : vector<8x32xf32>
    %12 = arith.mulf %11, %11 : vector<8x32xf32>
    %cst_9 = arith.constant dense<0.000000e+00> : vector<8xf32>
    %13 = vector.multi_reduction <add>, %12, %cst_9 [1] : vector<8x32xf32> to vector<8xf32>
    %14 = vector.shape_cast %13 : vector<8xf32> to vector<8x1xf32>
    %cst_10 = arith.constant 3.200000e+01 : f32
    %15 = vector.broadcast %cst_10 : f32 to vector<8x1xf32>
    %16 = arith.divf %14, %15 : vector<8x1xf32>
    %17 = vector.broadcast %9 : vector<8x1xf32> to vector<8x32xf32>
    %18 = arith.subf %3, %17 : vector<8x32xf32>
    %cst_11 = arith.constant 9.99999996E-13 : f32
    %19 = vector.broadcast %cst_11 : f32 to vector<8x1xf32>
    %20 = arith.addf %16, %19 : vector<8x1xf32>
    %21 = math.rsqrt %20 : vector<8x1xf32>
    %22 = vector.broadcast %21 : vector<8x1xf32> to vector<8x32xf32>
    %23 = arith.mulf %18, %22 : vector<8x32xf32>
    %24 = vector.broadcast %4 : vector<1x32xf32> to vector<8x32xf32>
    %25 = arith.mulf %23, %24 : vector<8x32xf32>
    %26 = vector.broadcast %5 : vector<1x32xf32> to vector<8x32xf32>
    %27 = arith.addf %25, %26 : vector<8x32xf32>
    %28 = arith.truncf %27 : vector<8x32xf32> to vector<8x32xbf16>
    %c0_12 = arith.constant 0 : index
    %c0_13 = arith.constant 0 : index
    %c0_14 = arith.constant 0 : index
    %29 = vector.load %arg3[%c0_12, %c0_13, %c0_14] : memref<2x32x192xbf16, #tpu.memory_space<vmem>>, vector<1x32x96xbf16>
    %30 = vector.shape_cast %29 : vector<1x32x96xbf16> to vector<32x96xbf16>
    %cst_15 = arith.constant dense<0.000000e+00> : vector<8x96xf32>
    %31 = tpu.matmul %28, %30, %cst_15 {dimension_numbers = #tpu.dot_dimension_numbers<[1], [0], [0], [1], [0, 0, 1, 1], [], []>} : vector<8x32xbf16>, vector<32x96xbf16>, vector<8x96xf32> -> vector<8x96xf32>
    %c2 = arith.constant 2 : index
    %c0_16 = arith.constant 0 : index
    %32 = vector.load %arg5[%c2, %c0_16] : memref<18x96xf32, #tpu.memory_space<vmem>>, vector<1x96xf32>
    %33 = vector.broadcast %32 : vector<1x96xf32> to vector<8x96xf32>
    %34 = arith.addf %31, %33 : vector<8x96xf32>
    %35 = vector.extract_strided_slice %34 {offsets = [0, 0], sizes = [8, 16], strides = [1, 1]} : vector<8x96xf32> to vector<8x16xf32>
    %36 = vector.extract_strided_slice %34 {offsets = [0, 32], sizes = [8, 16], strides = [1, 1]} : vector<8x96xf32> to vector<8x16xf32>
    %37 = vector.extract_strided_slice %34 {offsets = [0, 64], sizes = [8, 16], strides = [1, 1]} : vector<8x96xf32> to vector<8x16xf32>
    %38 = arith.truncf %35 : vector<8x16xf32> to vector<8x16xbf16>
    %39 = arith.truncf %36 : vector<8x16xf32> to vector<8x16xbf16>
    %cst_17 = arith.constant dense<0.000000e+00> : vector<8x8xf32>
    %40 = tpu.matmul %38, %39, %cst_17 {dimension_numbers = #tpu.dot_dimension_numbers<[1], [1], [0], [0], [0, 0, 1, 0], [], []>} : vector<8x16xbf16>, vector<8x16xbf16>, vector<8x8xf32> -> vector<8x8xf32>
    %cst_18 = arith.constant 2.500000e-01 : f32
    %41 = vector.broadcast %cst_18 : f32 to vector<8x8xf32>
    %42 = arith.mulf %40, %41 : vector<8x8xf32>
    %43 = vector.broadcast %1 : vector<1x8xf32> to vector<8x8xf32>
    %44 = arith.addf %42, %43 : vector<8x8xf32>
    %cst_19 = arith.constant dense<0xFF800000> : vector<8xf32>
    %45 = vector.multi_reduction <maximumf>, %44, %cst_19 [1] : vector<8x8xf32> to vector<8xf32>
    %46 = vector.shape_cast %45 : vector<8xf32> to vector<8x1xf32>
    %47 = vector.broadcast %46 : vector<8x1xf32> to vector<8x8xf32>
    %48 = arith.subf %44, %47 : vector<8x8xf32>
    %49 = math.exp %48 : vector<8x8xf32>
    %cst_20 = arith.constant dense<0.000000e+00> : vector<8xf32>
    %50 = vector.multi_reduction <add>, %49, %cst_20 [1] : vector<8x8xf32> to vector<8xf32>
    %51 = vector.shape_cast %50 : vector<8xf32> to vector<8x1xf32>
    %52 = tpu.reciprocal %51 {approx = true} : vector<8x1xf32> -> vector<8x1xf32>
    %53 = vector.broadcast %52 : vector<8x1xf32> to vector<8x8xf32>
    %54 = arith.mulf %49, %53 : vector<8x8xf32>
    %55 = arith.truncf %54 : vector<8x8xf32> to vector<8x8xbf16>
    %56 = arith.truncf %37 : vector<8x16xf32> to vector<8x16xbf16>
    %cst_21 = arith.constant dense<0.000000e+00> : vector<8x16xf32>
    %57 = tpu.matmul %55, %56, %cst_21 {dimension_numbers = #tpu.dot_dimension_numbers<[1], [0], [0], [1], [0, 0, 1, 1], [], []>} : vector<8x8xbf16>, vector<8x16xbf16>, vector<8x16xf32> -> vector<8x16xf32>
    %58 = vector.extract_strided_slice %34 {offsets = [0, 16], sizes = [8, 16], strides = [1, 1]} : vector<8x96xf32> to vector<8x16xf32>
    %59 = vector.extract_strided_slice %34 {offsets = [0, 48], sizes = [8, 16], strides = [1, 1]} : vector<8x96xf32> to vector<8x16xf32>
    %60 = vector.extract_strided_slice %34 {offsets = [0, 80], sizes = [8, 16], strides = [1, 1]} : vector<8x96xf32> to vector<8x16xf32>
    %61 = arith.truncf %58 : vector<8x16xf32> to vector<8x16xbf16>
    %62 = arith.truncf %59 : vector<8x16xf32> to vector<8x16xbf16>
    %cst_22 = arith.constant dense<0.000000e+00> : vector<8x8xf32>
    %63 = tpu.matmul %61, %62, %cst_22 {dimension_numbers = #tpu.dot_dimension_numbers<[1], [1], [0], [0], [0, 0, 1, 0], [], []>} : vector<8x16xbf16>, vector<8x16xbf16>, vector<8x8xf32> -> vector<8x8xf32>
    %cst_23 = arith.constant 2.500000e-01 : f32
    %64 = vector.broadcast %cst_23 : f32 to vector<8x8xf32>
    %65 = arith.mulf %63, %64 : vector<8x8xf32>
    %66 = vector.broadcast %1 : vector<1x8xf32> to vector<8x8xf32>
    %67 = arith.addf %65, %66 : vector<8x8xf32>
    %cst_24 = arith.constant dense<0xFF800000> : vector<8xf32>
    %68 = vector.multi_reduction <maximumf>, %67, %cst_24 [1] : vector<8x8xf32> to vector<8xf32>
    %69 = vector.shape_cast %68 : vector<8xf32> to vector<8x1xf32>
    %70 = vector.broadcast %69 : vector<8x1xf32> to vector<8x8xf32>
    %71 = arith.subf %67, %70 : vector<8x8xf32>
    %72 = math.exp %71 : vector<8x8xf32>
    %cst_25 = arith.constant dense<0.000000e+00> : vector<8xf32>
    %73 = vector.multi_reduction <add>, %72, %cst_25 [1] : vector<8x8xf32> to vector<8xf32>
    %74 = vector.shape_cast %73 : vector<8xf32> to vector<8x1xf32>
    %75 = tpu.reciprocal %74 {approx = true} : vector<8x1xf32> -> vector<8x1xf32>
    %76 = vector.broadcast %75 : vector<8x1xf32> to vector<8x8xf32>
    %77 = arith.mulf %72, %76 : vector<8x8xf32>
    %78 = arith.truncf %77 : vector<8x8xf32> to vector<8x8xbf16>
    %79 = arith.truncf %60 : vector<8x16xf32> to vector<8x16xbf16>
    %cst_26 = arith.constant dense<0.000000e+00> : vector<8x16xf32>
    %80 = tpu.matmul %78, %79, %cst_26 {dimension_numbers = #tpu.dot_dimension_numbers<[1], [0], [0], [1], [0, 0, 1, 1], [], []>} : vector<8x8xbf16>, vector<8x16xbf16>, vector<8x16xf32> -> vector<8x16xf32>
    %81 = tpu.concatenate %57, %80 in 1 : vector<8x16xf32>, vector<8x16xf32> -> vector<8x32xf32>
    %82 = arith.truncf %81 : vector<8x32xf32> to vector<8x32xbf16>
    %c0_27 = arith.constant 0 : index
    %c0_28 = arith.constant 0 : index
    %c96 = arith.constant 96 : index
    %83 = vector.load %arg3[%c0_27, %c0_28, %c96] : memref<2x32x192xbf16, #tpu.memory_space<vmem>>, vector<1x32x32xbf16>
    %84 = vector.shape_cast %83 : vector<1x32x32xbf16> to vector<32x32xbf16>
    %cst_29 = arith.constant dense<0.000000e+00> : vector<8x32xf32>
    %85 = tpu.matmul %82, %84, %cst_29 {dimension_numbers = #tpu.dot_dimension_numbers<[1], [0], [0], [1], [0, 0, 1, 1], [], []>} : vector<8x32xbf16>, vector<32x32xbf16>, vector<8x32xf32> -> vector<8x32xf32>
    %c3 = arith.constant 3 : index
    %c0_30 = arith.constant 0 : index
    %86 = vector.load %arg5[%c3, %c0_30] : memref<18x96xf32, #tpu.memory_space<vmem>>, vector<1x32xf32>
    %87 = vector.broadcast %86 : vector<1x32xf32> to vector<8x32xf32>
    %88 = arith.addf %85, %87 : vector<8x32xf32>
    %89 = arith.addf %88, %27 : vector<8x32xf32>
    %c4 = arith.constant 4 : index
    %c0_31 = arith.constant 0 : index
    %90 = vector.load %arg5[%c4, %c0_31] : memref<18x96xf32, #tpu.memory_space<vmem>>, vector<1x32xf32>
    %c5 = arith.constant 5 : index
    %c0_32 = arith.constant 0 : index
    %91 = vector.load %arg5[%c5, %c0_32] : memref<18x96xf32, #tpu.memory_space<vmem>>, vector<1x32xf32>
    %cst_33 = arith.constant dense<0.000000e+00> : vector<8xf32>
    %92 = vector.multi_reduction <add>, %89, %cst_33 [1] : vector<8x32xf32> to vector<8xf32>
    %93 = vector.shape_cast %92 : vector<8xf32> to vector<8x1xf32>
    %cst_34 = arith.constant 3.200000e+01 : f32
    %94 = vector.broadcast %cst_34 : f32 to vector<8x1xf32>
    %95 = arith.divf %93, %94 : vector<8x1xf32>
    %96 = vector.broadcast %95 : vector<8x1xf32> to vector<8x32xf32>
    %97 = arith.subf %89, %96 : vector<8x32xf32>
    %98 = arith.mulf %97, %97 : vector<8x32xf32>
    %cst_35 = arith.constant dense<0.000000e+00> : vector<8xf32>
    %99 = vector.multi_reduction <add>, %98, %cst_35 [1] : vector<8x32xf32> to vector<8xf32>
    %100 = vector.shape_cast %99 : vector<8xf32> to vector<8x1xf32>
    %cst_36 = arith.constant 3.200000e+01 : f32
    %101 = vector.broadcast %cst_36 : f32 to vector<8x1xf32>
    %102 = arith.divf %100, %101 : vector<8x1xf32>
    %103 = vector.broadcast %95 : vector<8x1xf32> to vector<8x32xf32>
    %104 = arith.subf %89, %103 : vector<8x32xf32>
    %cst_37 = arith.constant 9.99999996E-13 : f32
    %105 = vector.broadcast %cst_37 : f32 to vector<8x1xf32>
    %106 = arith.addf %102, %105 : vector<8x1xf32>
    %107 = math.rsqrt %106 : vector<8x1xf32>
    %108 = vector.broadcast %107 : vector<8x1xf32> to vector<8x32xf32>
    %109 = arith.mulf %104, %108 : vector<8x32xf32>
    %110 = vector.broadcast %90 : vector<1x32xf32> to vector<8x32xf32>
    %111 = arith.mulf %109, %110 : vector<8x32xf32>
    %112 = vector.broadcast %91 : vector<1x32xf32> to vector<8x32xf32>
    %113 = arith.addf %111, %112 : vector<8x32xf32>
    %114 = arith.truncf %113 : vector<8x32xf32> to vector<8x32xbf16>
    %c0_38 = arith.constant 0 : index
    %c0_39 = arith.constant 0 : index
    %c128 = arith.constant 128 : index
    %115 = vector.load %arg3[%c0_38, %c0_39, %c128] : memref<2x32x192xbf16, #tpu.memory_space<vmem>>, vector<1x32x64xbf16>
    %116 = vector.shape_cast %115 : vector<1x32x64xbf16> to vector<32x64xbf16>
    %cst_40 = arith.constant dense<0.000000e+00> : vector<8x64xf32>
    %117 = tpu.matmul %114, %116, %cst_40 {dimension_numbers = #tpu.dot_dimension_numbers<[1], [0], [0], [1], [0, 0, 1, 1], [], []>} : vector<8x32xbf16>, vector<32x64xbf16>, vector<8x64xf32> -> vector<8x64xf32>
    %c6 = arith.constant 6 : index
    %c0_41 = arith.constant 0 : index
    %118 = vector.load %arg5[%c6, %c0_41] : memref<18x96xf32, #tpu.memory_space<vmem>>, vector<1x64xf32>
    %119 = vector.broadcast %118 : vector<1x64xf32> to vector<8x64xf32>
    %120 = arith.addf %117, %119 : vector<8x64xf32>
    %121 = arith.mulf %120, %120 : vector<8x64xf32>
    %122 = arith.mulf %120, %121 : vector<8x64xf32>
    %cst_42 = arith.constant 4.471500e-02 : f32
    %123 = vector.broadcast %cst_42 : f32 to vector<8x64xf32>
    %124 = arith.mulf %123, %122 : vector<8x64xf32>
    %125 = arith.addf %120, %124 : vector<8x64xf32>
    %cst_43 = arith.constant 0.797884583 : f32
    %126 = vector.broadcast %cst_43 : f32 to vector<8x64xf32>
    %127 = arith.mulf %126, %125 : vector<8x64xf32>
    %128 = math.tanh %127 : vector<8x64xf32>
    %cst_44 = arith.constant 1.000000e+00 : f32
    %129 = vector.broadcast %cst_44 : f32 to vector<8x64xf32>
    %130 = arith.addf %129, %128 : vector<8x64xf32>
    %cst_45 = arith.constant 5.000000e-01 : f32
    %131 = vector.broadcast %cst_45 : f32 to vector<8x64xf32>
    %132 = arith.mulf %131, %130 : vector<8x64xf32>
    %133 = arith.mulf %120, %132 : vector<8x64xf32>
    %134 = arith.truncf %133 : vector<8x64xf32> to vector<8x64xbf16>
    %c0_46 = arith.constant 0 : index
    %c0_47 = arith.constant 0 : index
    %c0_48 = arith.constant 0 : index
    %135 = vector.load %arg4[%c0_46, %c0_47, %c0_48] : memref<2x64x32xbf16, #tpu.memory_space<vmem>>, vector<1x64x32xbf16>
    %136 = vector.shape_cast %135 : vector<1x64x32xbf16> to vector<64x32xbf16>
    %cst_49 = arith.constant dense<0.000000e+00> : vector<8x32xf32>
    %137 = tpu.matmul %134, %136, %cst_49 {dimension_numbers = #tpu.dot_dimension_numbers<[1], [0], [0], [1], [0, 0, 1, 1], [], []>} : vector<8x64xbf16>, vector<64x32xbf16>, vector<8x32xf32> -> vector<8x32xf32>
    %c7 = arith.constant 7 : index
    %c0_50 = arith.constant 0 : index
    %138 = vector.load %arg5[%c7, %c0_50] : memref<18x96xf32, #tpu.memory_space<vmem>>, vector<1x32xf32>
    %139 = vector.broadcast %138 : vector<1x32xf32> to vector<8x32xf32>
    %140 = arith.addf %137, %139 : vector<8x32xf32>
    %141 = arith.addf %140, %113 : vector<8x32xf32>
    %c8 = arith.constant 8 : index
    %c0_51 = arith.constant 0 : index
    %142 = vector.load %arg5[%c8, %c0_51] : memref<18x96xf32, #tpu.memory_space<vmem>>, vector<1x32xf32>
    %c9 = arith.constant 9 : index
    %c0_52 = arith.constant 0 : index
    %143 = vector.load %arg5[%c9, %c0_52] : memref<18x96xf32, #tpu.memory_space<vmem>>, vector<1x32xf32>
    %cst_53 = arith.constant dense<0.000000e+00> : vector<8xf32>
    %144 = vector.multi_reduction <add>, %141, %cst_53 [1] : vector<8x32xf32> to vector<8xf32>
    %145 = vector.shape_cast %144 : vector<8xf32> to vector<8x1xf32>
    %cst_54 = arith.constant 3.200000e+01 : f32
    %146 = vector.broadcast %cst_54 : f32 to vector<8x1xf32>
    %147 = arith.divf %145, %146 : vector<8x1xf32>
    %148 = vector.broadcast %147 : vector<8x1xf32> to vector<8x32xf32>
    %149 = arith.subf %141, %148 : vector<8x32xf32>
    %150 = arith.mulf %149, %149 : vector<8x32xf32>
    %cst_55 = arith.constant dense<0.000000e+00> : vector<8xf32>
    %151 = vector.multi_reduction <add>, %150, %cst_55 [1] : vector<8x32xf32> to vector<8xf32>
    %152 = vector.shape_cast %151 : vector<8xf32> to vector<8x1xf32>
    %cst_56 = arith.constant 3.200000e+01 : f32
    %153 = vector.broadcast %cst_56 : f32 to vector<8x1xf32>
    %154 = arith.divf %152, %153 : vector<8x1xf32>
    %155 = vector.broadcast %147 : vector<8x1xf32> to vector<8x32xf32>
    %156 = arith.subf %141, %155 : vector<8x32xf32>
    %cst_57 = arith.constant 9.99999996E-13 : f32
    %157 = vector.broadcast %cst_57 : f32 to vector<8x1xf32>
    %158 = arith.addf %154, %157 : vector<8x1xf32>
    %159 = math.rsqrt %158 : vector<8x1xf32>
    %160 = vector.broadcast %159 : vector<8x1xf32> to vector<8x32xf32>
    %161 = arith.mulf %156, %160 : vector<8x32xf32>
    %162 = vector.broadcast %142 : vector<1x32xf32> to vector<8x32xf32>
    %163 = arith.mulf %161, %162 : vector<8x32xf32>
    %164 = vector.broadcast %143 : vector<1x32xf32> to vector<8x32xf32>
    %165 = arith.addf %163, %164 : vector<8x32xf32>
    %166 = arith.truncf %165 : vector<8x32xf32> to vector<8x32xbf16>
    %c1_58 = arith.constant 1 : index
    %c0_59 = arith.constant 0 : index
    %c0_60 = arith.constant 0 : index
    %167 = vector.load %arg3[%c1_58, %c0_59, %c0_60] : memref<2x32x192xbf16, #tpu.memory_space<vmem>>, vector<1x32x96xbf16>
    %168 = vector.shape_cast %167 : vector<1x32x96xbf16> to vector<32x96xbf16>
    %cst_61 = arith.constant dense<0.000000e+00> : vector<8x96xf32>
    %169 = tpu.matmul %166, %168, %cst_61 {dimension_numbers = #tpu.dot_dimension_numbers<[1], [0], [0], [1], [0, 0, 1, 1], [], []>} : vector<8x32xbf16>, vector<32x96xbf16>, vector<8x96xf32> -> vector<8x96xf32>
    %c10 = arith.constant 10 : index
    %c0_62 = arith.constant 0 : index
    %170 = vector.load %arg5[%c10, %c0_62] : memref<18x96xf32, #tpu.memory_space<vmem>>, vector<1x96xf32>
    %171 = vector.broadcast %170 : vector<1x96xf32> to vector<8x96xf32>
    %172 = arith.addf %169, %171 : vector<8x96xf32>
    %173 = vector.extract_strided_slice %172 {offsets = [0, 0], sizes = [8, 16], strides = [1, 1]} : vector<8x96xf32> to vector<8x16xf32>
    %174 = vector.extract_strided_slice %172 {offsets = [0, 32], sizes = [8, 16], strides = [1, 1]} : vector<8x96xf32> to vector<8x16xf32>
    %175 = vector.extract_strided_slice %172 {offsets = [0, 64], sizes = [8, 16], strides = [1, 1]} : vector<8x96xf32> to vector<8x16xf32>
    %176 = arith.truncf %173 : vector<8x16xf32> to vector<8x16xbf16>
    %177 = arith.truncf %174 : vector<8x16xf32> to vector<8x16xbf16>
    %cst_63 = arith.constant dense<0.000000e+00> : vector<8x8xf32>
    %178 = tpu.matmul %176, %177, %cst_63 {dimension_numbers = #tpu.dot_dimension_numbers<[1], [1], [0], [0], [0, 0, 1, 0], [], []>} : vector<8x16xbf16>, vector<8x16xbf16>, vector<8x8xf32> -> vector<8x8xf32>
    %cst_64 = arith.constant 2.500000e-01 : f32
    %179 = vector.broadcast %cst_64 : f32 to vector<8x8xf32>
    %180 = arith.mulf %178, %179 : vector<8x8xf32>
    %181 = vector.broadcast %1 : vector<1x8xf32> to vector<8x8xf32>
    %182 = arith.addf %180, %181 : vector<8x8xf32>
    %cst_65 = arith.constant dense<0xFF800000> : vector<8xf32>
    %183 = vector.multi_reduction <maximumf>, %182, %cst_65 [1] : vector<8x8xf32> to vector<8xf32>
    %184 = vector.shape_cast %183 : vector<8xf32> to vector<8x1xf32>
    %185 = vector.broadcast %184 : vector<8x1xf32> to vector<8x8xf32>
    %186 = arith.subf %182, %185 : vector<8x8xf32>
    %187 = math.exp %186 : vector<8x8xf32>
    %cst_66 = arith.constant dense<0.000000e+00> : vector<8xf32>
    %188 = vector.multi_reduction <add>, %187, %cst_66 [1] : vector<8x8xf32> to vector<8xf32>
    %189 = vector.shape_cast %188 : vector<8xf32> to vector<8x1xf32>
    %190 = tpu.reciprocal %189 {approx = true} : vector<8x1xf32> -> vector<8x1xf32>
    %191 = vector.broadcast %190 : vector<8x1xf32> to vector<8x8xf32>
    %192 = arith.mulf %187, %191 : vector<8x8xf32>
    %193 = arith.truncf %192 : vector<8x8xf32> to vector<8x8xbf16>
    %194 = arith.truncf %175 : vector<8x16xf32> to vector<8x16xbf16>
    %cst_67 = arith.constant dense<0.000000e+00> : vector<8x16xf32>
    %195 = tpu.matmul %193, %194, %cst_67 {dimension_numbers = #tpu.dot_dimension_numbers<[1], [0], [0], [1], [0, 0, 1, 1], [], []>} : vector<8x8xbf16>, vector<8x16xbf16>, vector<8x16xf32> -> vector<8x16xf32>
    %196 = vector.extract_strided_slice %172 {offsets = [0, 16], sizes = [8, 16], strides = [1, 1]} : vector<8x96xf32> to vector<8x16xf32>
    %197 = vector.extract_strided_slice %172 {offsets = [0, 48], sizes = [8, 16], strides = [1, 1]} : vector<8x96xf32> to vector<8x16xf32>
    %198 = vector.extract_strided_slice %172 {offsets = [0, 80], sizes = [8, 16], strides = [1, 1]} : vector<8x96xf32> to vector<8x16xf32>
    %199 = arith.truncf %196 : vector<8x16xf32> to vector<8x16xbf16>
    %200 = arith.truncf %197 : vector<8x16xf32> to vector<8x16xbf16>
    %cst_68 = arith.constant dense<0.000000e+00> : vector<8x8xf32>
    %201 = tpu.matmul %199, %200, %cst_68 {dimension_numbers = #tpu.dot_dimension_numbers<[1], [1], [0], [0], [0, 0, 1, 0], [], []>} : vector<8x16xbf16>, vector<8x16xbf16>, vector<8x8xf32> -> vector<8x8xf32>
    %cst_69 = arith.constant 2.500000e-01 : f32
    %202 = vector.broadcast %cst_69 : f32 to vector<8x8xf32>
    %203 = arith.mulf %201, %202 : vector<8x8xf32>
    %204 = vector.broadcast %1 : vector<1x8xf32> to vector<8x8xf32>
    %205 = arith.addf %203, %204 : vector<8x8xf32>
    %cst_70 = arith.constant dense<0xFF800000> : vector<8xf32>
    %206 = vector.multi_reduction <maximumf>, %205, %cst_70 [1] : vector<8x8xf32> to vector<8xf32>
    %207 = vector.shape_cast %206 : vector<8xf32> to vector<8x1xf32>
    %208 = vector.broadcast %207 : vector<8x1xf32> to vector<8x8xf32>
    %209 = arith.subf %205, %208 : vector<8x8xf32>
    %210 = math.exp %209 : vector<8x8xf32>
    %cst_71 = arith.constant dense<0.000000e+00> : vector<8xf32>
    %211 = vector.multi_reduction <add>, %210, %cst_71 [1] : vector<8x8xf32> to vector<8xf32>
    %212 = vector.shape_cast %211 : vector<8xf32> to vector<8x1xf32>
    %213 = tpu.reciprocal %212 {approx = true} : vector<8x1xf32> -> vector<8x1xf32>
    %214 = vector.broadcast %213 : vector<8x1xf32> to vector<8x8xf32>
    %215 = arith.mulf %210, %214 : vector<8x8xf32>
    %216 = arith.truncf %215 : vector<8x8xf32> to vector<8x8xbf16>
    %217 = arith.truncf %198 : vector<8x16xf32> to vector<8x16xbf16>
    %cst_72 = arith.constant dense<0.000000e+00> : vector<8x16xf32>
    %218 = tpu.matmul %216, %217, %cst_72 {dimension_numbers = #tpu.dot_dimension_numbers<[1], [0], [0], [1], [0, 0, 1, 1], [], []>} : vector<8x8xbf16>, vector<8x16xbf16>, vector<8x16xf32> -> vector<8x16xf32>
    %219 = tpu.concatenate %195, %218 in 1 : vector<8x16xf32>, vector<8x16xf32> -> vector<8x32xf32>
    %220 = arith.truncf %219 : vector<8x32xf32> to vector<8x32xbf16>
    %c1_73 = arith.constant 1 : index
    %c0_74 = arith.constant 0 : index
    %c96_75 = arith.constant 96 : index
    %221 = vector.load %arg3[%c1_73, %c0_74, %c96_75] : memref<2x32x192xbf16, #tpu.memory_space<vmem>>, vector<1x32x32xbf16>
    %222 = vector.shape_cast %221 : vector<1x32x32xbf16> to vector<32x32xbf16>
    %cst_76 = arith.constant dense<0.000000e+00> : vector<8x32xf32>
    %223 = tpu.matmul %220, %222, %cst_76 {dimension_numbers = #tpu.dot_dimension_numbers<[1], [0], [0], [1], [0, 0, 1, 1], [], []>} : vector<8x32xbf16>, vector<32x32xbf16>, vector<8x32xf32> -> vector<8x32xf32>
    %c11 = arith.constant 11 : index
    %c0_77 = arith.constant 0 : index
    %224 = vector.load %arg5[%c11, %c0_77] : memref<18x96xf32, #tpu.memory_space<vmem>>, vector<1x32xf32>
    %225 = vector.broadcast %224 : vector<1x32xf32> to vector<8x32xf32>
    %226 = arith.addf %223, %225 : vector<8x32xf32>
    %227 = arith.addf %226, %165 : vector<8x32xf32>
    %c12 = arith.constant 12 : index
    %c0_78 = arith.constant 0 : index
    %228 = vector.load %arg5[%c12, %c0_78] : memref<18x96xf32, #tpu.memory_space<vmem>>, vector<1x32xf32>
    %c13 = arith.constant 13 : index
    %c0_79 = arith.constant 0 : index
    %229 = vector.load %arg5[%c13, %c0_79] : memref<18x96xf32, #tpu.memory_space<vmem>>, vector<1x32xf32>
    %cst_80 = arith.constant dense<0.000000e+00> : vector<8xf32>
    %230 = vector.multi_reduction <add>, %227, %cst_80 [1] : vector<8x32xf32> to vector<8xf32>
    %231 = vector.shape_cast %230 : vector<8xf32> to vector<8x1xf32>
    %cst_81 = arith.constant 3.200000e+01 : f32
    %232 = vector.broadcast %cst_81 : f32 to vector<8x1xf32>
    %233 = arith.divf %231, %232 : vector<8x1xf32>
    %234 = vector.broadcast %233 : vector<8x1xf32> to vector<8x32xf32>
    %235 = arith.subf %227, %234 : vector<8x32xf32>
    %236 = arith.mulf %235, %235 : vector<8x32xf32>
    %cst_82 = arith.constant dense<0.000000e+00> : vector<8xf32>
    %237 = vector.multi_reduction <add>, %236, %cst_82 [1] : vector<8x32xf32> to vector<8xf32>
    %238 = vector.shape_cast %237 : vector<8xf32> to vector<8x1xf32>
    %cst_83 = arith.constant 3.200000e+01 : f32
    %239 = vector.broadcast %cst_83 : f32 to vector<8x1xf32>
    %240 = arith.divf %238, %239 : vector<8x1xf32>
    %241 = vector.broadcast %233 : vector<8x1xf32> to vector<8x32xf32>
    %242 = arith.subf %227, %241 : vector<8x32xf32>
    %cst_84 = arith.constant 9.99999996E-13 : f32
    %243 = vector.broadcast %cst_84 : f32 to vector<8x1xf32>
    %244 = arith.addf %240, %243 : vector<8x1xf32>
    %245 = math.rsqrt %244 : vector<8x1xf32>
    %246 = vector.broadcast %245 : vector<8x1xf32> to vector<8x32xf32>
    %247 = arith.mulf %242, %246 : vector<8x32xf32>
    %248 = vector.broadcast %228 : vector<1x32xf32> to vector<8x32xf32>
    %249 = arith.mulf %247, %248 : vector<8x32xf32>
    %250 = vector.broadcast %229 : vector<1x32xf32> to vector<8x32xf32>
    %251 = arith.addf %249, %250 : vector<8x32xf32>
    %252 = arith.truncf %251 : vector<8x32xf32> to vector<8x32xbf16>
    %c1_85 = arith.constant 1 : index
    %c0_86 = arith.constant 0 : index
    %c128_87 = arith.constant 128 : index
    %253 = vector.load %arg3[%c1_85, %c0_86, %c128_87] : memref<2x32x192xbf16, #tpu.memory_space<vmem>>, vector<1x32x64xbf16>
    %254 = vector.shape_cast %253 : vector<1x32x64xbf16> to vector<32x64xbf16>
    %cst_88 = arith.constant dense<0.000000e+00> : vector<8x64xf32>
    %255 = tpu.matmul %252, %254, %cst_88 {dimension_numbers = #tpu.dot_dimension_numbers<[1], [0], [0], [1], [0, 0, 1, 1], [], []>} : vector<8x32xbf16>, vector<32x64xbf16>, vector<8x64xf32> -> vector<8x64xf32>
    %c14 = arith.constant 14 : index
    %c0_89 = arith.constant 0 : index
    %256 = vector.load %arg5[%c14, %c0_89] : memref<18x96xf32, #tpu.memory_space<vmem>>, vector<1x64xf32>
    %257 = vector.broadcast %256 : vector<1x64xf32> to vector<8x64xf32>
    %258 = arith.addf %255, %257 : vector<8x64xf32>
    %259 = arith.mulf %258, %258 : vector<8x64xf32>
    %260 = arith.mulf %258, %259 : vector<8x64xf32>
    %cst_90 = arith.constant 4.471500e-02 : f32
    %261 = vector.broadcast %cst_90 : f32 to vector<8x64xf32>
    %262 = arith.mulf %261, %260 : vector<8x64xf32>
    %263 = arith.addf %258, %262 : vector<8x64xf32>
    %cst_91 = arith.constant 0.797884583 : f32
    %264 = vector.broadcast %cst_91 : f32 to vector<8x64xf32>
    %265 = arith.mulf %264, %263 : vector<8x64xf32>
    %266 = math.tanh %265 : vector<8x64xf32>
    %cst_92 = arith.constant 1.000000e+00 : f32
    %267 = vector.broadcast %cst_92 : f32 to vector<8x64xf32>
    %268 = arith.addf %267, %266 : vector<8x64xf32>
    %cst_93 = arith.constant 5.000000e-01 : f32
    %269 = vector.broadcast %cst_93 : f32 to vector<8x64xf32>
    %270 = arith.mulf %269, %268 : vector<8x64xf32>
    %271 = arith.mulf %258, %270 : vector<8x64xf32>
    %272 = arith.truncf %271 : vector<8x64xf32> to vector<8x64xbf16>
    %c1_94 = arith.constant 1 : index
    %c0_95 = arith.constant 0 : index
    %c0_96 = arith.constant 0 : index
    %273 = vector.load %arg4[%c1_94, %c0_95, %c0_96] : memref<2x64x32xbf16, #tpu.memory_space<vmem>>, vector<1x64x32xbf16>
    %274 = vector.shape_cast %273 : vector<1x64x32xbf16> to vector<64x32xbf16>
    %cst_97 = arith.constant dense<0.000000e+00> : vector<8x32xf32>
    %275 = tpu.matmul %272, %274, %cst_97 {dimension_numbers = #tpu.dot_dimension_numbers<[1], [0], [0], [1], [0, 0, 1, 1], [], []>} : vector<8x64xbf16>, vector<64x32xbf16>, vector<8x32xf32> -> vector<8x32xf32>
    %c15 = arith.constant 15 : index
    %c0_98 = arith.constant 0 : index
    %276 = vector.load %arg5[%c15, %c0_98] : memref<18x96xf32, #tpu.memory_space<vmem>>, vector<1x32xf32>
    %277 = vector.broadcast %276 : vector<1x32xf32> to vector<8x32xf32>
    %278 = arith.addf %275, %277 : vector<8x32xf32>
    %279 = arith.addf %278, %251 : vector<8x32xf32>
    %c16 = arith.constant 16 : index
    %c0_99 = arith.constant 0 : index
    %280 = vector.load %arg5[%c16, %c0_99] : memref<18x96xf32, #tpu.memory_space<vmem>>, vector<1x32xf32>
    %c17 = arith.constant 17 : index
    %c0_100 = arith.constant 0 : index
    %281 = vector.load %arg5[%c17, %c0_100] : memref<18x96xf32, #tpu.memory_space<vmem>>, vector<1x32xf32>
    %cst_101 = arith.constant dense<0.000000e+00> : vector<8xf32>
    %282 = vector.multi_reduction <add>, %279, %cst_101 [1] : vector<8x32xf32> to vector<8xf32>
    %283 = vector.shape_cast %282 : vector<8xf32> to vector<8x1xf32>
    %cst_102 = arith.constant 3.200000e+01 : f32
    %284 = vector.broadcast %cst_102 : f32 to vector<8x1xf32>
    %285 = arith.divf %283, %284 : vector<8x1xf32>
    %286 = vector.broadcast %285 : vector<8x1xf32> to vector<8x32xf32>
    %287 = arith.subf %279, %286 : vector<8x32xf32>
    %288 = arith.mulf %287, %287 : vector<8x32xf32>
    %cst_103 = arith.constant dense<0.000000e+00> : vector<8xf32>
    %289 = vector.multi_reduction <add>, %288, %cst_103 [1] : vector<8x32xf32> to vector<8xf32>
    %290 = vector.shape_cast %289 : vector<8xf32> to vector<8x1xf32>
    %cst_104 = arith.constant 3.200000e+01 : f32
    %291 = vector.broadcast %cst_104 : f32 to vector<8x1xf32>
    %292 = arith.divf %290, %291 : vector<8x1xf32>
    %293 = vector.broadcast %285 : vector<8x1xf32> to vector<8x32xf32>
    %294 = arith.subf %279, %293 : vector<8x32xf32>
    %cst_105 = arith.constant 9.99999996E-13 : f32
    %295 = vector.broadcast %cst_105 : f32 to vector<8x1xf32>
    %296 = arith.addf %292, %295 : vector<8x1xf32>
    %297 = math.rsqrt %296 : vector<8x1xf32>
    %298 = vector.broadcast %297 : vector<8x1xf32> to vector<8x32xf32>
    %299 = arith.mulf %294, %298 : vector<8x32xf32>
    %300 = vector.broadcast %280 : vector<1x32xf32> to vector<8x32xf32>
    %301 = arith.mulf %299, %300 : vector<8x32xf32>
    %302 = vector.broadcast %281 : vector<1x32xf32> to vector<8x32xf32>
    %303 = arith.addf %301, %302 : vector<8x32xf32>
    %304 = tpu.iota {dimensions = array<i32: 0>} : vector<8x32xi32>
    %c1_i32 = arith.constant 1 : i32
    %305 = vector.broadcast %c1_i32 : i32 to vector<8x32xi32>
    %306 = arith.cmpi sge, %304, %305 : vector<8x32xi32>
    %c6_i32 = arith.constant 6 : i32
    %307 = vector.broadcast %c6_i32 : i32 to vector<8x32xi32>
    %308 = arith.cmpi sle, %304, %307 : vector<8x32xi32>
    %309 = arith.andi %306, %308 : vector<8x32xi1>
    %cst_106 = arith.constant 0.000000e+00 : f32
    %310 = vector.broadcast %cst_106 : f32 to vector<8x32xf32>
    %311 = arith.select %309, %303, %310 : vector<8x32xi1>, vector<8x32xf32>
    %cst_107 = arith.constant dense<0.000000e+00> : vector<32xf32>
    %312 = vector.multi_reduction <add>, %311, %cst_107 [0] : vector<8x32xf32> to vector<32xf32>
    %313 = vector.shape_cast %312 : vector<32xf32> to vector<1x32xf32>
    %314 = arith.mulf %313, %313 : vector<1x32xf32>
    %cst_108 = arith.constant dense<0.000000e+00> : vector<1xf32>
    %315 = vector.multi_reduction <add>, %314, %cst_108 [1] : vector<1x32xf32> to vector<1xf32>
    %316 = vector.shape_cast %315 : vector<1xf32> to vector<1x1xf32>
    %cst_109 = arith.constant 1.000000e-24 : f32
    %317 = vector.broadcast %cst_109 : f32 to vector<1x1xf32>
    %318 = arith.maximumf %316, %317 : vector<1x1xf32>
    %319 = math.rsqrt %318 : vector<1x1xf32>
    %320 = vector.broadcast %319 : vector<1x1xf32> to vector<1x32xf32>
    %321 = arith.mulf %313, %320 : vector<1x32xf32>
    %c0_110 = arith.constant 0 : index
    %c0_111 = arith.constant 0 : index
    %c0_112 = arith.constant 0 : index
    %322 = vector.load %arg6[%c0_110, %c0_111, %c0_112] : memref<1x1x32xf32, #tpu.memory_space<vmem>>, vector<1x1x32xf32>
    %323 = vector.shape_cast %322 : vector<1x1x32xf32> to vector<1x32xf32>
    %324 = vector.shape_cast %321 : vector<1x32xf32> to vector<1x1x32xf32>
    tpu.vector_store %arg6[%c0_110, %c0_111, %c0_112], %324 {strides = array<i32>} : memref<1x1x32xf32, #tpu.memory_space<vmem>>, vector<1x1x32xf32>,
    return
  }
  func.func @transform_0(%arg0: i32) -> (i32, i32, i32) {
    %c0_i32 = arith.constant 0 : i32
    %c0_i32_0 = arith.constant 0 : i32
    %c0_i32_1 = arith.constant 0 : i32
    return %arg0, %c0_i32, %c0_i32_0 : i32, i32, i32
  }
  func.func @transform_1(%arg0: i32) -> (i32, i32, i32) {
    %c0_i32 = arith.constant 0 : i32
    %c0_i32_0 = arith.constant 0 : i32
    %c0_i32_1 = arith.constant 0 : i32
    return %arg0, %c0_i32, %c0_i32_0 : i32, i32, i32
  }
  func.func @transform_2(%arg0: i32) -> (i32, i32, i32) {
    %c0_i32 = arith.constant 0 : i32
    %c0_i32_0 = arith.constant 0 : i32
    %c0_i32_1 = arith.constant 0 : i32
    %c0_i32_2 = arith.constant 0 : i32
    return %c0_i32, %c0_i32_0, %c0_i32_1 : i32, i32, i32
  }
  func.func @transform_3(%arg0: i32) -> (i32, i32, i32) {
    %c0_i32 = arith.constant 0 : i32
    %c0_i32_0 = arith.constant 0 : i32
    %c0_i32_1 = arith.constant 0 : i32
    %c0_i32_2 = arith.constant 0 : i32
    return %c0_i32, %c0_i32_0, %c0_i32_1 : i32, i32, i32
  }
  func.func @transform_4(%arg0: i32) -> (i32, i32) {
    %c0_i32 = arith.constant 0 : i32
    %c0_i32_0 = arith.constant 0 : i32
    %c0_i32_1 = arith.constant 0 : i32
    return %c0_i32, %c0_i32_0 : i32, i32
  }
  func.func @transform_5(%arg0: i32) -> (i32, i32, i32) {
    %c0_i32 = arith.constant 0 : i32
    %c0_i32_0 = arith.constant 0 : i32
    %c0_i32_1 = arith.constant 0 : i32
    return %arg0, %c0_i32, %c0_i32_0 : i32, i32, i32
  }
}

</mosaic_0001>

<llo_original>
// kernel: labse_encode.1
$region0: #{labse_encode.1}
  #allocation0 [shape = 'u32[]', space=smem, size = 0x4, offset = 0x4, fixed_abs, tag = 'smem constant byte address 0x4 - core index']
  #allocation1 [shape = 'u32[144,128]{1,0:T(1,128)}', space=vmem, size = 0x12000, scoped, tag = 'internal scratch']
  %s0 = inlined_call_operand.vmem [shape: f32[2,8,32], index: 0, kind: input, shape index: {}]
  %s1 = inlined_call_operand.vmem [shape: f32[2,1,8], index: 1, kind: input, shape index: {}]
  %s2 = inlined_call_operand.vmem [shape: bf16[2,32,192], index: 2, kind: input, shape index: {}]
  %s3 = inlined_call_operand.vmem [shape: bf16[2,64,32], index: 3, kind: input, shape index: {}]
  %s4 = inlined_call_operand.vmem [shape: f32[18,96], index: 4, kind: input, shape index: {}]
  %s5 = inlined_call_operand.hbm [shape: f32[2,1,32], index: 5, kind: output, shape index: {}]
  %s6 = sld [smem:[#allocation0]]
  $region53: #{labse_encode.1} parent=0
    _
  %s8 = ssub.s32 1, %s6
  %s9 = scalar_select 0, %s8, %s6
  $region1: #{labse_encode.1} parent=0
    #allocation2 [shape = 'u8[1024]{0}', space=vmem, size = 0x400, scoped, tag = 'output window, operand 0']
    #allocation3 [shape = 's32[2]{0}', space=sflag, size = 0x8, scoped, tag = 'scoped memory for labse_encode.1']
    %10 = vsyncpa [#allocation3], 0
    %s11 = scalar_lea.sflag [#allocation3], 1
    %12 = vsyncpa %s11, 0
    loop: start=0, step=1, limit=4
    $region2: #{labse_encode.1} parent=1 // loop_pre_header
      _
    $region3: #{labse_encode.1} parent=1 // loop_header
      %s14 = sphi 0, %s18
      %p15 = scmp.ge.s32.totalorder %s14, 4
      %s24 = sphi 0, %s26
      %s27 = sphi 0, %s24
      %s28 = sphi 0, %s27
      %s44 = sphi 0, %s28
      %s50 = sphi 0, %s52
      %s53 = sphi 0, %s50
      %s54 = sphi 0, %s53
      %s70 = sphi 0, %s54
      %s74 = sphi 0, %s74
      %s76 = sphi 0, %s74
      %s77 = sphi 0, %s76
      %s91 = sphi 0, %s77
      %s95 = sphi 0, %s95
      %s97 = sphi 0, %s95
      %s98 = sphi 0, %s97
      %s112 = sphi 0, %s98
      %s116 = sphi 0, %s116
      %s118 = sphi 0, %s116
      %s119 = sphi 0, %s118
      %s133 = sphi 0, %s119
      %s139 = sphi 0, %s141
      %s142 = sphi 0, %s139
      %s143 = sphi 0, %s142
      %s159 = sphi 0, %s143
    $region4: #{labse_encode.1} parent=1 // loop_header_branch
      %17 = sbr.rel (%p15) target = $region8
    $region5: #{labse_encode.1} parent=1 // loop_body
      %s19 = ssub.s32 %s14, 1
      %s20 = ssub.s32 %s14, 2
      %s21 = sadd.s32 %s14, 1
      %s22 = ssub.s32 %s14, %s21
      %p23 = scmp.eq.s32.totalorder %s22, 0
      %s25 = sadd.s32 %s24, 1
      %s26 = scalar_select %p23, %s24, %s25
      %p29 = pneg %p23
      %p30 = scmp.eq.s32.totalorder %s14, 1
      %p31 = por %p29, %p30
      %p32 = scmp.ne.s32.totalorder %s24, %s27
      %p33 = scmp.eq.s32.totalorder %s14, 0
      %p34 = por %p32, %p33
      %p35 = scmp.ne.s32.totalorder %s24, %s27
      %p36 = scmp.eq.s32.totalorder %s19, 1
      %p37 = por %p35, %p36
      %p38 = scmp.ne.s32.totalorder %s27, %s28
      %p39 = scmp.eq.s32.totalorder %s19, 0
      %p40 = por %p38, %p39
      %p41 = scmp.ne.s32.totalorder %s27, %s28
      %p42 = scmp.eq.s32.totalorder %s20, 1
      %p43 = por %p41, %p42
      %p45 = scmp.ne.s32.totalorder %s28, %s44
      %p46 = scmp.eq.s32.totalorder %s20, 0
      %p47 = por %p45, %p46
      %s48 = ssub.s32 %s14, %s21
      %p49 = scmp.eq.s32.totalorder %s48, 0
      %s51 = sadd.s32 %s50, 1
      %s52 = scalar_select %p49, %s50, %s51
      %p55 = pneg %p49
      %p56 = scmp.eq.s32.totalorder %s14, 1
      %p57 = por %p55, %p56
      %p58 = scmp.ne.s32.totalorder %s50, %s53
      %p59 = scmp.eq.s32.totalorder %s14, 0
      %p60 = por %p58, %p59
      %p61 = scmp.ne.s32.totalorder %s50, %s53
      %p62 = scmp.eq.s32.totalorder %s19, 1
      %p63 = por %p61, %p62
      %p64 = scmp.ne.s32.totalorder %s53, %s54
      %p65 = scmp.eq.s32.totalorder %s19, 0
      %p66 = por %p64, %p65
      %p67 = scmp.ne.s32.totalorder %s53, %s54
      %p68 = scmp.eq.s32.totalorder %s20, 1
      %p69 = por %p67, %p68
      %p71 = scmp.ne.s32.totalorder %s54, %s70
      %p72 = scmp.eq.s32.totalorder %s20, 0
      %p73 = por %p71, %p72
      %s75 = sadd.s32 %s74, 1
      %p78 = scmp.eq.s32.totalorder %s14, 1
      %p79 = scmp.ne.s32.totalorder %s74, %s76
      %p80 = scmp.eq.s32.totalorder %s14, 0
      %p81 = por %p79, %p80
      %p82 = scmp.ne.s32.totalorder %s74, %s76
      %p83 = scmp.eq.s32.totalorder %s19, 1
      %p84 = por %p82, %p83
      %p85 = scmp.ne.s32.totalorder %s76, %s77
      %p86 = scmp.eq.s32.totalorder %s19, 0
      %p87 = por %p85, %p86
      %p88 = scmp.ne.s32.totalorder %s76, %s77
      %p89 = scmp.eq.s32.totalorder %s20, 1
      %p90 = por %p88, %p89
      %p92 = scmp.ne.s32.totalorder %s77, %s91
      %p93 = scmp.eq.s32.totalorder %s20, 0
      %p94 = por %p92, %p93
      %s96 = sadd.s32 %s95, 1
      %p99 = scmp.eq.s32.totalorder %s14, 1
      %p100 = scmp.ne.s32.totalorder %s95, %s97
      %p101 = scmp.eq.s32.totalorder %s14, 0
      %p102 = por %p100, %p101
      %p103 = scmp.ne.s32.totalorder %s95, %s97
      %p104 = scmp.eq.s32.totalorder %s19, 1
      %p105 = por %p103, %p104
      %p106 = scmp.ne.s32.totalorder %s97, %s98
      %p107 = scmp.eq.s32.totalorder %s19, 0
      %p108 = por %p106, %p107
      %p109 = scmp.ne.s32.totalorder %s97, %s98
      %p110 = scmp.eq.s32.totalorder %s20, 1
      %p111 = por %p109, %p110
      %p113 = scmp.ne.s32.totalorder %s98, %s112
      %p114 = scmp.eq.s32.totalorder %s20, 0
      %p115 = por %p113, %p114
      %s117 = sadd.s32 %s116, 1
      %p120 = scmp.eq.s32.totalorder %s14, 1
      %p121 = scmp.ne.s32.totalorder %s116, %s118
      %p122 = scmp.eq.s32.totalorder %s14, 0
      %p123 = por %p121, %p122
      %p124 = scmp.ne.s32.totalorder %s116, %s118
      %p125 = scmp.eq.s32.totalorder %s19, 1
      %p126 = por %p124, %p125
      %p127 = scmp.ne.s32.totalorder %s118, %s119
      %p128 = scmp.eq.s32.totalorder %s19, 0
      %p129 = por %p127, %p128
      %p130 = scmp.ne.s32.totalorder %s118, %s119
      %p131 = scmp.eq.s32.totalorder %s20, 1
      %p132 = por %p130, %p131
      %p134 = scmp.ne.s32.totalorder %s119, %s133
      %p135 = scmp.eq.s32.totalorder %s20, 0
      %p136 = por %p134, %p135
      %s137 = ssub.s32 %s14, %s21
      %p138 = scmp.eq.s32.totalorder %s137, 0
      %s140 = sadd.s32 %s139, 1
      %s141 = scalar_select %p138, %s139, %s140
      %p144 = pneg %p138
      %p145 = scmp.eq.s32.totalorder %s14, 1
      %p146 = por %p144, %p145
      %p147 = scmp.ne.s32.totalorder %s139, %s142
      %p148 = scmp.eq.s32.totalorder %s14, 0
      %p149 = por %p147, %p148
      %p150 = scmp.ne.s32.totalorder %s139, %s142
      %p151 = scmp.eq.s32.totalorder %s19, 1
      %p152 = por %p150, %p151
      %p153 = scmp.ne.s32.totalorder %s142, %s143
      %p154 = scmp.eq.s32.totalorder %s19, 0
      %p155 = por %p153, %p154
      %p156 = scmp.ne.s32.totalorder %s142, %s143
      %p157 = scmp.eq.s32.totalorder %s20, 1
      %p158 = por %p156, %p157
      %p160 = scmp.ne.s32.totalorder %s143, %s159
      %p161 = scmp.eq.s32.totalorder %s20, 0
      %p162 = por %p160, %p161
      %p163 = scmp.le.s32.totalorder 1, %s14
      %p164 = scmp.lt.s32.totalorder %s14, 3
      %p165 = pnand %p163, %p164
      %p166 = pneg %p165
      // Predicated region
      $region9: #{labse_encode.1} parent=5 // pred_check
        _
      $region10: #{labse_encode.1} parent=5 // pred_check_branch
        %168 = sbr.rel (%p165) target = $region12
      $region11: #{labse_encode.1} parent=5 // pred_region
        %s169 = ssub.s32 %s14, 1
        // Predicated region
        $region13: #{labse_encode.1} parent=11 // pred_check
          %p170 = pneg %p87
        $region14: #{labse_encode.1} parent=11 // pred_check_branch
          %172 = sbr.rel (%p170) target = $region16
        $region15: #{labse_encode.1} parent=11 // pred_region
          _
        $region16: #{labse_encode.1} parent=11 // pred_fallthru
          _
        // Predicated region
        $region17: #{labse_encode.1} parent=11 // pred_check
          %p173 = pneg %p108
        $region18: #{labse_encode.1} parent=11 // pred_check_branch
          %175 = sbr.rel (%p173) target = $region20
        $region19: #{labse_encode.1} parent=11 // pred_region
          _
        $region20: #{labse_encode.1} parent=11 // pred_fallthru
          _
        // Predicated region
        $region21: #{labse_encode.1} parent=11 // pred_check
          %p176 = pneg %p129
        $region22: #{labse_encode.1} parent=11 // pred_check_branch
          %178 = sbr.rel (%p176) target = $region24
        $region23: #{labse_encode.1} parent=11 // pred_region
          _
        $region24: #{labse_encode.1} parent=11 // pred_fallthru
          _
      $region12: #{labse_encode.1} parent=5 // pred_fallthru
        _
      %p179 = scmp.lt.s32.totalorder %s14, 2
      // Predicated region
      $region25: #{labse_encode.1} parent=5 // pred_check
        %p180 = pneg %p179
      $region26: #{labse_encode.1} parent=5 // pred_check_branch
        %182 = sbr.rel (%p180) target = $region28
      $region27: #{labse_encode.1} parent=5 // pred_region
        // Predicated region
        $region29: #{labse_encode.1} parent=27 // pred_check
          %p183 = pneg %p34
        $region30: #{labse_encode.1} parent=27 // pred_check_branch
          %185 = sbr.rel (%p183) target = $region32
        $region31: #{labse_encode.1} parent=27 // pred_region
          %p186 = scmp.lt.s32.totalorder %s14, 1
          %s187 = scalar_select %p186, %s14, 1
          %s188 = smul.addr %s187, 8
          %s189 = scalar_lea.vmem %s0, %s188
        $region32: #{labse_encode.1} parent=27 // pred_fallthru
          _
        // Predicated region
        $region33: #{labse_encode.1} parent=27 // pred_check
          %p190 = pneg %p60
        $region34: #{labse_encode.1} parent=27 // pred_check_branch
          %192 = sbr.rel (%p190) target = $region36
        $region35: #{labse_encode.1} parent=27 // pred_region
          %p193 = scmp.lt.s32.totalorder %s14, 1
          %s194 = scalar_select %p193, %s14, 1
          %s195 = scalar_lea.vmem %s1, %s194
        $region36: #{labse_encode.1} parent=27 // pred_fallthru
          _
      $region28: #{labse_encode.1} parent=5 // pred_fallthru
        _
      %p196 = scmp.le.s32.totalorder 1, %s14
      %p197 = scmp.lt.s32.totalorder %s14, 3
      %p198 = pnand %p196, %p197
      %p199 = pneg %p198
      // Predicated region
      $region37: #{labse_encode.1} parent=5 // pred_check
        _
      $region38: #{labse_encode.1} parent=5 // pred_check_branch
        %201 = sbr.rel (%p198) target = $region40
      $region39: #{labse_encode.1} parent=5 // pred_region
        %s202 = ssub.s32 %s14, 1
        %p203 = scmp.lt.s32.totalorder %s19, 1
        %s204 = scalar_select %p203, %s19, 1
        %s205 = smul.addr %s204, 8
        %s206 = scalar_lea.vmem %s0, %s205
        %p207 = pneg %p40
        %p208 = pneg %p37
        %p209 = scmp.lt.s32.totalorder %s19, 1
        %s210 = scalar_select %p209, %s19, 1
        %s211 = scalar_lea.vmem %s1, %s210
        %p212 = pneg %p66
        %p213 = pneg %p63
        %p214 = pneg %p87
        %p215 = pneg %p84
        %p216 = pneg %p108
        %p217 = pneg %p105
        %p218 = pneg %p129
        %p219 = pneg %p126
        %p220 = pneg %p155
        %p221 = pneg %p152
        %s222 = sand.u32 %s142, 1
        %s223 = scalar_lea.sflag [#allocation3], %s222
        %s224 = sand.u32 %s142, 1
        %s225 = scalar_lea.vmem [#allocation2], %s224
        %p226 = scmp.lt.s32.totalorder %s19, 1
        %s227 = scalar_select %p226, %s19, 1
        %s228 = smul.addr %s227, 8
        %s229 = scalar_lea.vmem %s0, %s228
        %p230 = scmp.lt.s32.totalorder %s19, 1
        %s231 = scalar_select %p230, %s19, 1
        %s232 = scalar_lea.vmem %s1, %s231
        %v234 = vld [vmem:[%s232] sm:$0x1]
        %v235 = vld [vmem:[%s229] sm:$0xff]
        %v236 = vld [vmem:[%s4] sm:$0x1]
        %v237 = vld [vmem:[%s4 + $0x1] sm:$0x1]
        %vm238 = vcmask 261120
        %v239 = vsel %vm238, %v235, 0.0
        %240 = vadd.xlane.f32.xlu0 %v239
        %v241 = vpop.xlane.xlu0 %240
        %v242 = vrcp.pop 32.0
        %v243 = vmul.f32 %v241, %v242
        %v244 = vsub.f32 %v235, %v243
        %v245 = vmul.f32 %v244, %v244
        %v246 = vsel %vm238, %v245, 0.0
        %247 = vadd.xlane.f32.xlu0 %v246
        %v248 = vpop.xlane.xlu0 %247
        %v249 = vmul.f32 %v248, %v242
        %v250 = vadd.f32 %v249, 1e-12
        %v251 = vrsqrt.pop %v250
        %v252 = vmul.f32 %v244, %v251
        %v253 = vlaneseq
        %v254 = vshrl.u32 %v253, 7
        %v255 = vsub.s32 0, %v254
        %v256 = vrot.slane %v236, %v255
        %v257 = vmul.f32 %v252, %v256
        %v258 = vlaneseq
        %v259 = vshrl.u32 %v258, 7
        %v260 = vsub.s32 0, %v259
        %v261 = vrot.slane %v237, %v260
        %v262 = vadd.f32 %v257, %v261
        %v263 = vpack.c.bf16 %v262, %v262
        %v264 = vld [vmem:[%s2] sm:$0xf]
        %v265 = vld [vmem:[%s2 + $0x8] sm:$0xf]
        %v266 = vld [vmem:[%s2 + $0x10] sm:$0xf]
        %v267 = vld [vmem:[%s2 + $0x18] sm:$0xf]
        %v268 = vld [vmem:[%s4 + $0x2] sm:$0x1]
        %v269 = vlaneseq
        %v270 = vshrl.u32 %v269, 7
        %v271 = vsub.s32 0, %v270
        %v272 = vrot.slane %v268, %v271
        %v277 = vunpack.c.l.b16 %v264
        %v278 = vunpack.c.l.b16 %v265
        %v279 = vunpack.c.l.b16 %v266
        %v280 = vunpack.c.l.b16 %v267
        %v281 = vpack.c.b16 %v278, %v277
        %v282 = vpack.c.b16 %v280, %v279
        %v286 = vsel %vm238, %v263, 0
        %288 = vmatprep.subr.bf16.mxu0 0
        %289 = vmatpush1.bf16.msra.mxu0 %v281
        %290 = vmatprep.subr.bf16.mxu0 0
        %291 = vmatpush1.bf16.msra.mxu0 %v282
        %292 = vmatprep.subr.bf16.mxu0 0
        %293 = vmatpush1.bf16.msra.mxu0 0
        %294 = vmatprep.subr.bf16.mxu0 0
        %295 = vmatpush1.bf16.msra.mxu0 0
        %296 = vmatprep.subr.bf16.mxu0 0
        %297 = vmatpush1.bf16.msra.mxu0 0
        %298 = vmatprep.subr.bf16.mxu0 0
        %299 = vmatpush1.bf16.msra.mxu0 0
        %300 = vmatprep.subr.bf16.mxu0 0
        %301 = vmatpush1.bf16.msra.mxu0 0
        %302 = vmatprep.subr.bf16.mxu0 0
        %303 = vmatpush1.bf16.msra.mxu0 0
        %304 = vmatprep.subr.bf16.mxu0 0
        %305 = vmatpush1.bf16.msra.mxu0 0
        %306 = vmatprep.subr.bf16.mxu0 0
        %307 = vmatpush1.bf16.msra.mxu0 0
        %308 = vmatprep.subr.bf16.mxu0 0
        %309 = vmatpush1.bf16.msra.mxu0 0
        %310 = vmatprep.subr.bf16.mxu0 0
        %311 = vmatpush1.bf16.msra.mxu0 0
        %312 = vmatprep.subr.bf16.mxu0 0
        %313 = vmatpush1.bf16.msra.mxu0 0
        %314 = vmatprep.subr.bf16.mxu0 0
        %315 = vmatpush1.bf16.msra.mxu0 0
        %316 = vmatprep.subr.bf16.mxu0 0
        %317 = vmatpush1.bf16.msra.mxu0 0
        %318 = vmatprep.subr.bf16.mxu0 0
        %319 = vmatpush1.bf16.msra.mxu0 0
        %320 = vmatprep.mubr.bf16.mxu0 0
        %321 = vmatmul.mubr.bf16.gmra.mrb[0].mxu0 %v286
        %v322 = vpop.f32.mrb[0].mxu0
        %v323 = vadd.f32 %v272, %v322
        %v324 = vpop.f32.mrb[0].mxu0
        %v325 = vpop.f32.mrb[0].mxu0
        %v326 = vpop.f32.mrb[0].mxu0
        %327 = vdwg.mxu0
        %v328 = vpack.c.bf16 %v323, %v323
        %330 = vrot.lane.b32.xlu0 %v328, 96
        %v331 = vpop.permute.xlu0 %330
        %vm332 = vcmask 130048
        %v334 = vsel %vm332, %v328, 0
        %v337 = vsel %vm332, %v331, 0
        %339 = vmatprep.subr.bf16.mxu0 0
        %340 = vmatpush1.bf16.xpose.msra.mxu0 %v337
        %341 = vmatprep.subr.bf16.mxu0 0
        %342 = vmatpush1.bf16.xpose.msra.mxu0 0
        %343 = vmatprep.subr.bf16.mxu0 0
        %344 = vmatpush1.bf16.xpose.msra.mxu0 0
        %345 = vmatprep.subr.bf16.mxu0 0
        %346 = vmatpush1.bf16.xpose.msra.mxu0 0
        %347 = vmatprep.subr.bf16.mxu0 0
        %348 = vmatpush1.bf16.xpose.msra.mxu0 0
        %349 = vmatprep.subr.bf16.mxu0 0
        %350 = vmatpush1.bf16.xpose.msra.mxu0 0
        %351 = vmatprep.subr.bf16.mxu0 0
        %352 = vmatpush1.bf16.xpose.msra.mxu0 0
        %353 = vmatprep.subr.bf16.mxu0 0
        %354 = vmatpush1.bf16.xpose.msra.mxu0 0
        %355 = vmatprep.subr.bf16.mxu0 0
        %356 = vmatpush1.bf16.xpose.msra.mxu0 0
        %357 = vmatprep.subr.bf16.mxu0 0
        %358 = vmatpush1.bf16.xpose.msra.mxu0 0
        %359 = vmatprep.subr.bf16.mxu0 0
        %360 = vmatpush1.bf16.xpose.msra.mxu0 0
        %361 = vmatprep.subr.bf16.mxu0 0
        %362 = vmatpush1.bf16.xpose.msra.mxu0 0
        %363 = vmatprep.subr.bf16.mxu0 0
        %364 = vmatpush1.bf16.xpose.msra.mxu0 0
        %365 = vmatprep.subr.bf16.mxu0 0
        %366 = vmatpush1.bf16.xpose.msra.mxu0 0
        %367 = vmatprep.subr.bf16.mxu0 0
        %368 = vmatpush1.bf16.xpose.msra.mxu0 0
        %369 = vmatprep.subr.bf16.mxu0 0
        %370 = vmatpush1.bf16.xpose.msra.mxu0 0
        %371 = vmatprep.mubr.bf16.mxu0 0
        %372 = vmatmul.mubr.bf16.gmra.mrb[0].mxu0 %v334
        %v373 = vpop.f32.mrb[0].mxu0
        %v374 = vadd.f32 0.0, %v373
        %v375 = vpop.f32.mrb[0].mxu0
        %v376 = vpop.f32.mrb[0].mxu0
        %v377 = vpop.f32.mrb[0].mxu0
        %378 = vdwg.mxu0
        %v379 = vmul.f32 %v374, 0.25
        %v381 = vlaneseq
        %v382 = vshrl.u32 %v381, 7
        %v383 = vsub.s32 0, %v382
        %v384 = vrot.slane %v234, %v383
        %v386 = vadd.f32 %v379, %v384
        %vm387 = vcmask 64512
        %v388 = vsel %vm387, %v386, -inf
        %389 = vmax.xlane.f32.xlu0 %v388
        %v390 = vpop.xlane.xlu0 %389
        %v391 = vsub.f32 %v386, %v390
        %v392 = vmul.f32 %v391, 1.442695
        %v393 = vpow.pop %v392
        %v394 = vsel %vm387, %v393, 0.0
        %395 = vadd.xlane.f32.xlu0 %v394
        %v396 = vpop.xlane.xlu0 %395
        %v397 = vrcp.pop %v396
        %v398 = vmul.f32 %v393, %v397
        %v399 = vpack.c.bf16 %v398, %v398
        %400 = vrot.lane.b32.xlu0 %v328, 64
        %v401 = vpop.permute.xlu0 %400
        %v403 = vsel %vm387, %v399, 0
        %vm405 = vcmask 1043456
        %v407 = vsel %vm405, %v401, 0
        %409 = vmatprep.subr.bf16.mxu0 0
        %410 = vmatpush1.bf16.msra.mxu0 %v407
        %411 = vmatprep.subr.bf16.mxu0 0
        %412 = vmatpush1.bf16.msra.mxu0 0
        %413 = vmatprep.subr.bf16.mxu0 0
        %414 = vmatpush1.bf16.msra.mxu0 0
        %415 = vmatprep.subr.bf16.mxu0 0
        %416 = vmatpush1.bf16.msra.mxu0 0
        %417 = vmatprep.subr.bf16.mxu0 0
        %418 = vmatpush1.bf16.msra.mxu0 0
        %419 = vmatprep.subr.bf16.mxu0 0
        %420 = vmatpush1.bf16.msra.mxu0 0
        %421 = vmatprep.subr.bf16.mxu0 0
        %422 = vmatpush1.bf16.msra.mxu0 0
        %423 = vmatprep.subr.bf16.mxu0 0
        %424 = vmatpush1.bf16.msra.mxu0 0
        %425 = vmatprep.subr.bf16.mxu0 0
        %426 = vmatpush1.bf16.msra.mxu0 0
        %427 = vmatprep.subr.bf16.mxu0 0
        %428 = vmatpush1.bf16.msra.mxu0 0
        %429 = vmatprep.subr.bf16.mxu0 0
        %430 = vmatpush1.bf16.msra.mxu0 0
        %431 = vmatprep.subr.bf16.mxu0 0
        %432 = vmatpush1.bf16.msra.mxu0 0
        %433 = vmatprep.subr.bf16.mxu0 0
        %434 = vmatpush1.bf16.msra.mxu0 0
        %435 = vmatprep.subr.bf16.mxu0 0
        %436 = vmatpush1.bf16.msra.mxu0 0
        %437 = vmatprep.subr.bf16.mxu0 0
        %438 = vmatpush1.bf16.msra.mxu0 0
        %439 = vmatprep.subr.bf16.mxu0 0
        %440 = vmatpush1.bf16.msra.mxu0 0
        %441 = vmatprep.mubr.bf16.mxu0 0
        %442 = vmatmul.mubr.bf16.gmra.mrb[0].mxu0 %v403
        %v443 = vpop.f32.mrb[0].mxu0
        %v444 = vadd.f32 0.0, %v443
        %v445 = vpop.f32.mrb[0].mxu0
        %v446 = vpop.f32.mrb[0].mxu0
        %v447 = vpop.f32.mrb[0].mxu0
        %448 = vdwg.mxu0
        %449 = vrot.lane.b32.xlu0 %v328, 112
        %v450 = vpop.permute.xlu0 %449
        %451 = vrot.lane.b32.xlu0 %v328, 80
        %v452 = vpop.permute.xlu0 %451
        %v454 = vsel %vm332, %v450, 0
        %v457 = vsel %vm332, %v452, 0
        %459 = vmatprep.subr.bf16.mxu0 0
        %460 = vmatpush1.bf16.xpose.msra.mxu0 %v457
        %461 = vmatprep.subr.bf16.mxu0 0
        %462 = vmatpush1.bf16.xpose.msra.mxu0 0
        %463 = vmatprep.subr.bf16.mxu0 0
        %464 = vmatpush1.bf16.xpose.msra.mxu0 0
        %465 = vmatprep.subr.bf16.mxu0 0
        %466 = vmatpush1.bf16.xpose.msra.mxu0 0
        %467 = vmatprep.subr.bf16.mxu0 0
        %468 = vmatpush1.bf16.xpose.msra.mxu0 0
        %469 = vmatprep.subr.bf16.mxu0 0
        %470 = vmatpush1.bf16.xpose.msra.mxu0 0
        %471 = vmatprep.subr.bf16.mxu0 0
        %472 = vmatpush1.bf16.xpose.msra.mxu0 0
        %473 = vmatprep.subr.bf16.mxu0 0
        %474 = vmatpush1.bf16.xpose.msra.mxu0 0
        %475 = vmatprep.subr.bf16.mxu0 0
        %476 = vmatpush1.bf16.xpose.msra.mxu0 0
        %477 = vmatprep.subr.bf16.mxu0 0
        %478 = vmatpush1.bf16.xpose.msra.mxu0 0
        %479 = vmatprep.subr.bf16.mxu0 0
        %480 = vmatpush1.bf16.xpose.msra.mxu0 0
        %481 = vmatprep.subr.bf16.mxu0 0
        %482 = vmatpush1.bf16.xpose.msra.mxu0 0
        %483 = vmatprep.subr.bf16.mxu0 0
        %484 = vmatpush1.bf16.xpose.msra.mxu0 0
        %485 = vmatprep.subr.bf16.mxu0 0
        %486 = vmatpush1.bf16.xpose.msra.mxu0 0
        %487 = vmatprep.subr.bf16.mxu0 0
        %488 = vmatpush1.bf16.xpose.msra.mxu0 0
        %489 = vmatprep.subr.bf16.mxu0 0
        %490 = vmatpush1.bf16.xpose.msra.mxu0 0
        %491 = vmatprep.mubr.bf16.mxu0 0
        %492 = vmatmul.mubr.bf16.gmra.mrb[0].mxu0 %v454
        %v493 = vpop.f32.mrb[0].mxu0
        %v494 = vadd.f32 0.0, %v493
        %v495 = vpop.f32.mrb[0].mxu0
        %v496 = vpop.f32.mrb[0].mxu0
        %v497 = vpop.f32.mrb[0].mxu0
        %498 = vdwg.mxu0
        %v499 = vmul.f32 %v494, 0.25
        %v500 = vadd.f32 %v499, %v384
        %v501 = vsel %vm387, %v500, -inf
        %502 = vmax.xlane.f32.xlu0 %v501
        %v503 = vpop.xlane.xlu0 %502
        %v504 = vsub.f32 %v500, %v503
        %v505 = vmul.f32 %v504, 1.442695
        %v506 = vpow.pop %v505
        %v507 = vsel %vm387, %v506, 0.0
        %508 = vadd.xlane.f32.xlu0 %v507
        %v509 = vpop.xlane.xlu0 %508
        %v510 = vrcp.pop %v509
        %v511 = vmul.f32 %v506, %v510
        %v512 = vpack.c.bf16 %v511, %v511
        %513 = vrot.lane.b32.xlu0 %v328, 48
        %v514 = vpop.permute.xlu0 %513
        %v516 = vsel %vm387, %v512, 0
        %v519 = vsel %vm405, %v514, 0
        %521 = vmatprep.subr.bf16.mxu0 0
        %522 = vmatpush1.bf16.msra.mxu0 %v519
        %523 = vmatprep.subr.bf16.mxu0 0
        %524 = vmatpush1.bf16.msra.mxu0 0
        %525 = vmatprep.subr.bf16.mxu0 0
        %526 = vmatpush1.bf16.msra.mxu0 0
        %527 = vmatprep.subr.bf16.mxu0 0
        %528 = vmatpush1.bf16.msra.mxu0 0
        %529 = vmatprep.subr.bf16.mxu0 0
        %530 = vmatpush1.bf16.msra.mxu0 0
        %531 = vmatprep.subr.bf16.mxu0 0
        %532 = vmatpush1.bf16.msra.mxu0 0
        %533 = vmatprep.subr.bf16.mxu0 0
        %534 = vmatpush1.bf16.msra.mxu0 0
        %535 = vmatprep.subr.bf16.mxu0 0
        %536 = vmatpush1.bf16.msra.mxu0 0
        %537 = vmatprep.subr.bf16.mxu0 0
        %538 = vmatpush1.bf16.msra.mxu0 0
        %539 = vmatprep.subr.bf16.mxu0 0
        %540 = vmatpush1.bf16.msra.mxu0 0
        %541 = vmatprep.subr.bf16.mxu0 0
        %542 = vmatpush1.bf16.msra.mxu0 0
        %543 = vmatprep.subr.bf16.mxu0 0
        %544 = vmatpush1.bf16.msra.mxu0 0
        %545 = vmatprep.subr.bf16.mxu0 0
        %546 = vmatpush1.bf16.msra.mxu0 0
        %547 = vmatprep.subr.bf16.mxu0 0
        %548 = vmatpush1.bf16.msra.mxu0 0
        %549 = vmatprep.subr.bf16.mxu0 0
        %550 = vmatpush1.bf16.msra.mxu0 0
        %551 = vmatprep.subr.bf16.mxu0 0
        %552 = vmatpush1.bf16.msra.mxu0 0
        %553 = vmatprep.mubr.bf16.mxu0 0
        %554 = vmatmul.mubr.bf16.gmra.mrb[0].mxu0 %v516
        %v555 = vpop.f32.mrb[0].mxu0
        %v556 = vadd.f32 0.0, %v555
        %v557 = vpop.f32.mrb[0].mxu0
        %v558 = vpop.f32.mrb[0].mxu0
        %v559 = vpop.f32.mrb[0].mxu0
        %560 = vdwg.mxu0
        %562 = vrot.lane.b32.xlu0 %v556, 16
        %v563 = vpop.permute.xlu0 %562
        %v565 = vsel %vm332, %v444, %v563
        %v566 = vpack.c.bf16 %v565, %v565
        %v567 = vld [vmem:[%s4 + $0x3] sm:$0x1]
        %v568 = vlaneseq
        %v569 = vshrl.u32 %v568, 7
        %v570 = vsub.s32 0, %v569
        %v571 = vrot.slane %v567, %v570
        %572 = vrot.lane.b32.xlu0 %v281, 32
        %v573 = vpop.permute.xlu0 %572
        %574 = vrot.lane.b32.xlu0 %v282, 32
        %v575 = vpop.permute.xlu0 %574
        %v579 = vsel %vm238, %v566, 0
        %581 = vmatprep.subr.bf16.mxu0 0
        %582 = vmatpush1.bf16.msra.mxu0 %v573
        %583 = vmatprep.subr.bf16.mxu0 0
        %584 = vmatpush1.bf16.msra.mxu0 %v575
        %585 = vmatprep.subr.bf16.mxu0 0
        %586 = vmatpush1.bf16.msra.mxu0 0
        %587 = vmatprep.subr.bf16.mxu0 0
        %588 = vmatpush1.bf16.msra.mxu0 0
        %589 = vmatprep.subr.bf16.mxu0 0
        %590 = vmatpush1.bf16.msra.mxu0 0
        %591 = vmatprep.subr.bf16.mxu0 0
        %592 = vmatpush1.bf16.msra.mxu0 0
        %593 = vmatprep.subr.bf16.mxu0 0
        %594 = vmatpush1.bf16.msra.mxu0 0
        %595 = vmatprep.subr.bf16.mxu0 0
        %596 = vmatpush1.bf16.msra.mxu0 0
        %597 = vmatprep.subr.bf16.mxu0 0
        %598 = vmatpush1.bf16.msra.mxu0 0
        %599 = vmatprep.subr.bf16.mxu0 0
        %600 = vmatpush1.bf16.msra.mxu0 0
        %601 = vmatprep.subr.bf16.mxu0 0
        %602 = vmatpush1.bf16.msra.mxu0 0
        %603 = vmatprep.subr.bf16.mxu0 0
        %604 = vmatpush1.bf16.msra.mxu0 0
        %605 = vmatprep.subr.bf16.mxu0 0
        %606 = vmatpush1.bf16.msra.mxu0 0
        %607 = vmatprep.subr.bf16.mxu0 0
        %608 = vmatpush1.bf16.msra.mxu0 0
        %609 = vmatprep.subr.bf16.mxu0 0
        %610 = vmatpush1.bf16.msra.mxu0 0
        %611 = vmatprep.subr.bf16.mxu0 0
        %612 = vmatpush1.bf16.msra.mxu0 0
        %613 = vmatprep.mubr.bf16.mxu0 0
        %614 = vmatmul.mubr.bf16.gmra.mrb[0].mxu0 %v579
        %v615 = vpop.f32.mrb[0].mxu0
        %v616 = vadd.f32 %v571, %v615
        %v617 = vpop.f32.mrb[0].mxu0
        %v618 = vpop.f32.mrb[0].mxu0
        %v619 = vpop.f32.mrb[0].mxu0
        %620 = vdwg.mxu0
        %v621 = vadd.f32 %v616, %v262
        %v622 = vld [vmem:[%s4 + $0x4] sm:$0x1]
        %v623 = vld [vmem:[%s4 + $0x5] sm:$0x1]
        %v624 = vsel %vm238, %v621, 0.0
        %625 = vadd.xlane.f32.xlu0 %v624
        %v626 = vpop.xlane.xlu0 %625
        %v627 = vmul.f32 %v626, %v242
        %v628 = vsub.f32 %v621, %v627
        %v629 = vmul.f32 %v628, %v628
        %v630 = vsel %vm238, %v629, 0.0
        %631 = vadd.xlane.f32.xlu0 %v630
        %v632 = vpop.xlane.xlu0 %631
        %v633 = vmul.f32 %v632, %v242
        %v634 = vadd.f32 %v633, 1e-12
        %v635 = vrsqrt.pop %v634
        %v636 = vmul.f32 %v628, %v635
        %v637 = vlaneseq
        %v638 = vshrl.u32 %v637, 7
        %v639 = vsub.s32 0, %v638
        %v640 = vrot.slane %v622, %v639
        %v641 = vmul.f32 %v636, %v640
        %v642 = vlaneseq
        %v643 = vshrl.u32 %v642, 7
        %v644 = vsub.s32 0, %v643
        %v645 = vrot.slane %v623, %v644
        %v646 = vadd.f32 %v641, %v645
        %v647 = vpack.c.bf16 %v646, %v646
        %v648 = vld [vmem:[%s2 + $0x4] sm:$0xf]
        %v649 = vld [vmem:[%s2 + $0xc] sm:$0xf]
        %v650 = vld [vmem:[%s2 + $0x14] sm:$0xf]
        %v651 = vld [vmem:[%s2 + $0x1c] sm:$0xf]
        %v652 = vld [vmem:[%s4 + $0x6] sm:$0x1]
        %v653 = vlaneseq
        %v654 = vshrl.u32 %v653, 7
        %v655 = vsub.s32 0, %v654
        %v656 = vrot.slane %v652, %v655
        %v661 = vunpack.c.l.b16 %v648
        %v662 = vunpack.c.l.b16 %v649
        %v663 = vunpack.c.l.b16 %v650
        %v664 = vunpack.c.l.b16 %v651
        %v665 = vpack.c.b16 %v662, %v661
        %v666 = vpack.c.b16 %v664, %v663
        %v670 = vsel %vm238, %v647, 0
        %672 = vmatprep.subr.bf16.mxu0 0
        %673 = vmatpush1.bf16.msra.mxu0 %v665
        %674 = vmatprep.subr.bf16.mxu0 0
        %675 = vmatpush1.bf16.msra.mxu0 %v666
        %676 = vmatprep.subr.bf16.mxu0 0
        %677 = vmatpush1.bf16.msra.mxu0 0
        %678 = vmatprep.subr.bf16.mxu0 0
        %679 = vmatpush1.bf16.msra.mxu0 0
        %680 = vmatprep.subr.bf16.mxu0 0
        %681 = vmatpush1.bf16.msra.mxu0 0
        %682 = vmatprep.subr.bf16.mxu0 0
        %683 = vmatpush1.bf16.msra.mxu0 0
        %684 = vmatprep.subr.bf16.mxu0 0
        %685 = vmatpush1.bf16.msra.mxu0 0
        %686 = vmatprep.subr.bf16.mxu0 0
        %687 = vmatpush1.bf16.msra.mxu0 0
        %688 = vmatprep.subr.bf16.mxu0 0
        %689 = vmatpush1.bf16.msra.mxu0 0
        %690 = vmatprep.subr.bf16.mxu0 0
        %691 = vmatpush1.bf16.msra.mxu0 0
        %692 = vmatprep.subr.bf16.mxu0 0
        %693 = vmatpush1.bf16.msra.mxu0 0
        %694 = vmatprep.subr.bf16.mxu0 0
        %695 = vmatpush1.bf16.msra.mxu0 0
        %696 = vmatprep.subr.bf16.mxu0 0
        %697 = vmatpush1.bf16.msra.mxu0 0
        %698 = vmatprep.subr.bf16.mxu0 0
        %699 = vmatpush1.bf16.msra.mxu0 0
        %700 = vmatprep.subr.bf16.mxu0 0
        %701 = vmatpush1.bf16.msra.mxu0 0
        %702 = vmatprep.subr.bf16.mxu0 0
        %703 = vmatpush1.bf16.msra.mxu0 0
        %704 = vmatprep.mubr.bf16.mxu0 0
        %705 = vmatmul.mubr.bf16.gmra.mrb[0].mxu0 %v670
        %v706 = vpop.f32.mrb[0].mxu0
        %v707 = vadd.f32 %v656, %v706
        %v708 = vpop.f32.mrb[0].mxu0
        %v709 = vpop.f32.mrb[0].mxu0
        %v710 = vpop.f32.mrb[0].mxu0
        %711 = vdwg.mxu0
        %v712 = vmul.f32 %v707, %v707
        %v713 = vmul.f32 %v707, %v712
        %v714 = vmul.f32 %v713, 0.044715
        %v715 = vadd.f32 %v707, %v714
        %v716 = vmul.f32 %v715, 0.7978846
        %v717 = vtanh.pop %v716
        %v718 = vadd.f32 %v717, 1.0
        %v719 = vmul.f32 %v718, 0.5
        %v720 = vmul.f32 %v707, %v719
        %v721 = vpack.c.bf16 %v720, %v720
        %v722 = vld [vmem:[%s3] sm:$0xf]
        %v723 = vld [vmem:[%s3 + $0x4] sm:$0xf]
        %v724 = vld [vmem:[%s3 + $0x8] sm:$0xf]
        %v725 = vld [vmem:[%s3 + $0xc] sm:$0xf]
        %v726 = vld [vmem:[%s3 + $0x10] sm:$0xf]
        %v727 = vld [vmem:[%s3 + $0x14] sm:$0xf]
        %v728 = vld [vmem:[%s3 + $0x18] sm:$0xf]
        %v729 = vld [vmem:[%s3 + $0x1c] sm:$0xf]
        %v730 = vld [vmem:[%s4 + $0x7] sm:$0x1]
        %v731 = vlaneseq
        %v732 = vshrl.u32 %v731, 7
        %v733 = vsub.s32 0, %v732
        %v734 = vrot.slane %v730, %v733
        %v743 = vunpack.c.l.b16 %v722
        %v744 = vunpack.c.l.b16 %v723
        %v745 = vunpack.c.l.b16 %v724
        %v746 = vunpack.c.l.b16 %v725
        %v747 = vunpack.c.l.b16 %v726
        %v748 = vunpack.c.l.b16 %v727
        %v749 = vunpack.c.l.b16 %v728
        %v750 = vunpack.c.l.b16 %v729
        %v751 = vpack.c.b16 %v744, %v743
        %v752 = vpack.c.b16 %v746, %v745
        %v753 = vpack.c.b16 %v748, %v747
        %v754 = vpack.c.b16 %v750, %v749
        %vm759 = vcmask 523264
        %v761 = vsel %vm759, %v721, 0
        %763 = vmatprep.subr.bf16.mxu0 0
        %764 = vmatpush1.bf16.msra.mxu0 %v751
        %765 = vmatprep.subr.bf16.mxu0 0
        %766 = vmatpush1.bf16.msra.mxu0 %v752
        %767 = vmatprep.subr.bf16.mxu0 0
        %768 = vmatpush1.bf16.msra.mxu0 %v753
        %769 = vmatprep.subr.bf16.mxu0 0
        %770 = vmatpush1.bf16.msra.mxu0 %v754
        %771 = vmatprep.subr.bf16.mxu0 0
        %772 = vmatpush1.bf16.msra.mxu0 0
        %773 = vmatprep.subr.bf16.mxu0 0
        %774 = vmatpush1.bf16.msra.mxu0 0
        %775 = vmatprep.subr.bf16.mxu0 0
        %776 = vmatpush1.bf16.msra.mxu0 0
        %777 = vmatprep.subr.bf16.mxu0 0
        %778 = vmatpush1.bf16.msra.mxu0 0
        %779 = vmatprep.subr.bf16.mxu0 0
        %780 = vmatpush1.bf16.msra.mxu0 0
        %781 = vmatprep.subr.bf16.mxu0 0
        %782 = vmatpush1.bf16.msra.mxu0 0
        %783 = vmatprep.subr.bf16.mxu0 0
        %784 = vmatpush1.bf16.msra.mxu0 0
        %785 = vmatprep.subr.bf16.mxu0 0
        %786 = vmatpush1.bf16.msra.mxu0 0
        %787 = vmatprep.subr.bf16.mxu0 0
        %788 = vmatpush1.bf16.msra.mxu0 0
        %789 = vmatprep.subr.bf16.mxu0 0
        %790 = vmatpush1.bf16.msra.mxu0 0
        %791 = vmatprep.subr.bf16.mxu0 0
        %792 = vmatpush1.bf16.msra.mxu0 0
        %793 = vmatprep.subr.bf16.mxu0 0
        %794 = vmatpush1.bf16.msra.mxu0 0
        %795 = vmatprep.mubr.bf16.mxu0 0
        %796 = vmatmul.mubr.bf16.gmra.mrb[0].mxu0 %v761
        %v797 = vpop.f32.mrb[0].mxu0
        %v798 = vadd.f32 %v734, %v797
        %v799 = vpop.f32.mrb[0].mxu0
        %v800 = vpop.f32.mrb[0].mxu0
        %v801 = vpop.f32.mrb[0].mxu0
        %802 = vdwg.mxu0
        %v803 = vadd.f32 %v798, %v646
        %v804 = vld [vmem:[%s4 + $0x8] sm:$0x1]
        %v805 = vld [vmem:[%s4 + $0x9] sm:$0x1]
        %v806 = vsel %vm238, %v803, 0.0
        %807 = vadd.xlane.f32.xlu0 %v806
        %v808 = vpop.xlane.xlu0 %807
        %v809 = vmul.f32 %v808, %v242
        %v810 = vsub.f32 %v803, %v809
        %v811 = vmul.f32 %v810, %v810
        %v812 = vsel %vm238, %v811, 0.0
        %813 = vadd.xlane.f32.xlu0 %v812
        %v814 = vpop.xlane.xlu0 %813
        %v815 = vmul.f32 %v814, %v242
        %v816 = vadd.f32 %v815, 1e-12
        %v817 = vrsqrt.pop %v816
        %v818 = vmul.f32 %v810, %v817
        %v819 = vlaneseq
        %v820 = vshrl.u32 %v819, 7
        %v821 = vsub.s32 0, %v820
        %v822 = vrot.slane %v804, %v821
        %v823 = vmul.f32 %v818, %v822
        %v824 = vlaneseq
        %v825 = vshrl.u32 %v824, 7
        %v826 = vsub.s32 0, %v825
        %v827 = vrot.slane %v805, %v826
        %v828 = vadd.f32 %v823, %v827
        %v829 = vpack.c.bf16 %v828, %v828
        %s830 = scalar_lea.vmem %s2, 32
        %v831 = vld [vmem:[%s830] sm:$0xf]
        %v832 = vld [vmem:[%s830 + $0x8] sm:$0xf]
        %v833 = vld [vmem:[%s830 + $0x10] sm:$0xf]
        %v834 = vld [vmem:[%s830 + $0x18] sm:$0xf]
        %v835 = vld [vmem:[%s4 + $0xa] sm:$0x1]
        %v836 = vlaneseq
        %v837 = vshrl.u32 %v836, 7
        %v838 = vsub.s32 0, %v837
        %v839 = vrot.slane %v835, %v838
        %v844 = vunpack.c.l.b16 %v831
        %v845 = vunpack.c.l.b16 %v832
        %v846 = vunpack.c.l.b16 %v833
        %v847 = vunpack.c.l.b16 %v834
        %v848 = vpack.c.b16 %v845, %v844
        %v849 = vpack.c.b16 %v847, %v846
        %v853 = vsel %vm238, %v829, 0
        %855 = vmatprep.subr.bf16.mxu0 0
        %856 = vmatpush1.bf16.msra.mxu0 %v848
        %857 = vmatprep.subr.bf16.mxu0 0
        %858 = vmatpush1.bf16.msra.mxu0 %v849
        %859 = vmatprep.subr.bf16.mxu0 0
        %860 = vmatpush1.bf16.msra.mxu0 0
        %861 = vmatprep.subr.bf16.mxu0 0
        %862 = vmatpush1.bf16.msra.mxu0 0
        %863 = vmatprep.subr.bf16.mxu0 0
        %864 = vmatpush1.bf16.msra.mxu0 0
        %865 = vmatprep.subr.bf16.mxu0 0
        %866 = vmatpush1.bf16.msra.mxu0 0
        %867 = vmatprep.subr.bf16.mxu0 0
        %868 = vmatpush1.bf16.msra.mxu0 0
        %869 = vmatprep.subr.bf16.mxu0 0
        %870 = vmatpush1.bf16.msra.mxu0 0
        %871 = vmatprep.subr.bf16.mxu0 0
        %872 = vmatpush1.bf16.msra.mxu0 0
        %873 = vmatprep.subr.bf16.mxu0 0
        %874 = vmatpush1.bf16.msra.mxu0 0
        %875 = vmatprep.subr.bf16.mxu0 0
        %876 = vmatpush1.bf16.msra.mxu0 0
        %877 = vmatprep.subr.bf16.mxu0 0
        %878 = vmatpush1.bf16.msra.mxu0 0
        %879 = vmatprep.subr.bf16.mxu0 0
        %880 = vmatpush1.bf16.msra.mxu0 0
        %881 = vmatprep.subr.bf16.mxu0 0
        %882 = vmatpush1.bf16.msra.mxu0 0
        %883 = vmatprep.subr.bf16.mxu0 0
        %884 = vmatpush1.bf16.msra.mxu0 0
        %885 = vmatprep.subr.bf16.mxu0 0
        %886 = vmatpush1.bf16.msra.mxu0 0
        %887 = vmatprep.mubr.bf16.mxu0 0
        %888 = vmatmul.mubr.bf16.gmra.mrb[0].mxu0 %v853
        %v889 = vpop.f32.mrb[0].mxu0
        %v890 = vadd.f32 %v839, %v889
        %v891 = vpop.f32.mrb[0].mxu0
        %v892 = vpop.f32.mrb[0].mxu0
        %v893 = vpop.f32.mrb[0].mxu0
        %894 = vdwg.mxu0
        %v895 = vpack.c.bf16 %v890, %v890
        %897 = vrot.lane.b32.xlu0 %v895, 96
        %v898 = vpop.permute.xlu0 %897
        %v900 = vsel %vm332, %v895, 0
        %v903 = vsel %vm332, %v898, 0
        %905 = vmatprep.subr.bf16.mxu0 0
        %906 = vmatpush1.bf16.xpose.msra.mxu0 %v903
        %907 = vmatprep.subr.bf16.mxu0 0
        %908 = vmatpush1.bf16.xpose.msra.mxu0 0
        %909 = vmatprep.subr.bf16.mxu0 0
        %910 = vmatpush1.bf16.xpose.msra.mxu0 0
        %911 = vmatprep.subr.bf16.mxu0 0
        %912 = vmatpush1.bf16.xpose.msra.mxu0 0
        %913 = vmatprep.subr.bf16.mxu0 0
        %914 = vmatpush1.bf16.xpose.msra.mxu0 0
        %915 = vmatprep.subr.bf16.mxu0 0
        %916 = vmatpush1.bf16.xpose.msra.mxu0 0
        %917 = vmatprep.subr.bf16.mxu0 0
        %918 = vmatpush1.bf16.xpose.msra.mxu0 0
        %919 = vmatprep.subr.bf16.mxu0 0
        %920 = vmatpush1.bf16.xpose.msra.mxu0 0
        %921 = vmatprep.subr.bf16.mxu0 0
        %922 = vmatpush1.bf16.xpose.msra.mxu0 0
        %923 = vmatprep.subr.bf16.mxu0 0
        %924 = vmatpush1.bf16.xpose.msra.mxu0 0
        %925 = vmatprep.subr.bf16.mxu0 0
        %926 = vmatpush1.bf16.xpose.msra.mxu0 0
        %927 = vmatprep.subr.bf16.mxu0 0
        %928 = vmatpush1.bf16.xpose.msra.mxu0 0
        %929 = vmatprep.subr.bf16.mxu0 0
        %930 = vmatpush1.bf16.xpose.msra.mxu0 0
        %931 = vmatprep.subr.bf16.mxu0 0
        %932 = vmatpush1.bf16.xpose.msra.mxu0 0
        %933 = vmatprep.subr.bf16.mxu0 0
        %934 = vmatpush1.bf16.xpose.msra.mxu0 0
        %935 = vmatprep.subr.bf16.mxu0 0
        %936 = vmatpush1.bf16.xpose.msra.mxu0 0
        %937 = vmatprep.mubr.bf16.mxu0 0
        %938 = vmatmul.mubr.bf16.gmra.mrb[0].mxu0 %v900
        %v939 = vpop.f32.mrb[0].mxu0
        %v940 = vadd.f32 0.0, %v939
        %v941 = vpop.f32.mrb[0].mxu0
        %v942 = vpop.f32.mrb[0].mxu0
        %v943 = vpop.f32.mrb[0].mxu0
        %944 = vdwg.mxu0
        %v945 = vmul.f32 %v940, 0.25
        %v946 = vadd.f32 %v945, %v384
        %v947 = vsel %vm387, %v946, -inf
        %948 = vmax.xlane.f32.xlu0 %v947
        %v949 = vpop.xlane.xlu0 %948
        %v950 = vsub.f32 %v946, %v949
        %v951 = vmul.f32 %v950, 1.442695
        %v952 = vpow.pop %v951
        %v953 = vsel %vm387, %v952, 0.0
        %954 = vadd.xlane.f32.xlu0 %v953
        %v955 = vpop.xlane.xlu0 %954
        %v956 = vrcp.pop %v955
        %v957 = vmul.f32 %v952, %v956
        %v958 = vpack.c.bf16 %v957, %v957
        %959 = vrot.lane.b32.xlu0 %v895, 64
        %v960 = vpop.permute.xlu0 %959
        %v962 = vsel %vm387, %v958, 0
        %v965 = vsel %vm405, %v960, 0
        %967 = vmatprep.subr.bf16.mxu0 0
        %968 = vmatpush1.bf16.msra.mxu0 %v965
        %969 = vmatprep.subr.bf16.mxu0 0
        %970 = vmatpush1.bf16.msra.mxu0 0
        %971 = vmatprep.subr.bf16.mxu0 0
        %972 = vmatpush1.bf16.msra.mxu0 0
        %973 = vmatprep.subr.bf16.mxu0 0
        %974 = vmatpush1.bf16.msra.mxu0 0
        %975 = vmatprep.subr.bf16.mxu0 0
        %976 = vmatpush1.bf16.msra.mxu0 0
        %977 = vmatprep.subr.bf16.mxu0 0
        %978 = vmatpush1.bf16.msra.mxu0 0
        %979 = vmatprep.subr.bf16.mxu0 0
        %980 = vmatpush1.bf16.msra.mxu0 0
        %981 = vmatprep.subr.bf16.mxu0 0
        %982 = vmatpush1.bf16.msra.mxu0 0
        %983 = vmatprep.subr.bf16.mxu0 0
        %984 = vmatpush1.bf16.msra.mxu0 0
        %985 = vmatprep.subr.bf16.mxu0 0
        %986 = vmatpush1.bf16.msra.mxu0 0
        %987 = vmatprep.subr.bf16.mxu0 0
        %988 = vmatpush1.bf16.msra.mxu0 0
        %989 = vmatprep.subr.bf16.mxu0 0
        %990 = vmatpush1.bf16.msra.mxu0 0
        %991 = vmatprep.subr.bf16.mxu0 0
        %992 = vmatpush1.bf16.msra.mxu0 0
        %993 = vmatprep.subr.bf16.mxu0 0
        %994 = vmatpush1.bf16.msra.mxu0 0
        %995 = vmatprep.subr.bf16.mxu0 0
        %996 = vmatpush1.bf16.msra.mxu0 0
        %997 = vmatprep.subr.bf16.mxu0 0
        %998 = vmatpush1.bf16.msra.mxu0 0
        %999 = vmatprep.mubr.bf16.mxu0 0
        %1000 = vmatmul.mubr.bf16.gmra.mrb[0].mxu0 %v962
        %v1001 = vpop.f32.mrb[0].mxu0
        %v1002 = vadd.f32 0.0, %v1001
        %v1003 = vpop.f32.mrb[0].mxu0
        %v1004 = vpop.f32.mrb[0].mxu0
        %v1005 = vpop.f32.mrb[0].mxu0
        %1006 = vdwg.mxu0
        %1007 = vrot.lane.b32.xlu0 %v895, 112
        %v1008 = vpop.permute.xlu0 %1007
        %1009 = vrot.lane.b32.xlu0 %v895, 80
        %v1010 = vpop.permute.xlu0 %1009
        %v1012 = vsel %vm332, %v1008, 0
        %v1015 = vsel %vm332, %v1010, 0
        %1017 = vmatprep.subr.bf16.mxu0 0
        %1018 = vmatpush1.bf16.xpose.msra.mxu0 %v1015
        %1019 = vmatprep.subr.bf16.mxu0 0
        %1020 = vmatpush1.bf16.xpose.msra.mxu0 0
        %1021 = vmatprep.subr.bf16.mxu0 0
        %1022 = vmatpush1.bf16.xpose.msra.mxu0 0
        %1023 = vmatprep.subr.bf16.mxu0 0
        %1024 = vmatpush1.bf16.xpose.msra.mxu0 0
        %1025 = vmatprep.subr.bf16.mxu0 0
        %1026 = vmatpush1.bf16.xpose.msra.mxu0 0
        %1027 = vmatprep.subr.bf16.mxu0 0
        %1028 = vmatpush1.bf16.xpose.msra.mxu0 0
        %1029 = vmatprep.subr.bf16.mxu0 0
        %1030 = vmatpush1.bf16.xpose.msra.mxu0 0
        %1031 = vmatprep.subr.bf16.mxu0 0
        %1032 = vmatpush1.bf16.xpose.msra.mxu0 0
        %1033 = vmatprep.subr.bf16.mxu0 0
        %1034 = vmatpush1.bf16.xpose.msra.mxu0 0
        %1035 = vmatprep.subr.bf16.mxu0 0
        %1036 = vmatpush1.bf16.xpose.msra.mxu0 0
        %1037 = vmatprep.subr.bf16.mxu0 0
        %1038 = vmatpush1.bf16.xpose.msra.mxu0 0
        %1039 = vmatprep.subr.bf16.mxu0 0
        %1040 = vmatpush1.bf16.xpose.msra.mxu0 0
        %1041 = vmatprep.subr.bf16.mxu0 0
        %1042 = vmatpush1.bf16.xpose.msra.mxu0 0
        %1043 = vmatprep.subr.bf16.mxu0 0
        %1044 = vmatpush1.bf16.xpose.msra.mxu0 0
        %1045 = vmatprep.subr.bf16.mxu0 0
        %1046 = vmatpush1.bf16.xpose.msra.mxu0 0
        %1047 = vmatprep.subr.bf16.mxu0 0
        %1048 = vmatpush1.bf16.xpose.msra.mxu0 0
        %1049 = vmatprep.mubr.bf16.mxu0 0
        %1050 = vmatmul.mubr.bf16.gmra.mrb[0].mxu0 %v1012
        %v1051 = vpop.f32.mrb[0].mxu0
        %v1052 = vadd.f32 0.0, %v1051
        %v1053 = vpop.f32.mrb[0].mxu0
        %v1054 = vpop.f32.mrb[0].mxu0
        %v1055 = vpop.f32.mrb[0].mxu0
        %1056 = vdwg.mxu0
        %v1057 = vmul.f32 %v1052, 0.25
        %v1058 = vadd.f32 %v1057, %v384
        %v1059 = vsel %vm387, %v1058, -inf
        %1060 = vmax.xlane.f32.xlu0 %v1059
        %v1061 = vpop.xlane.xlu0 %1060
        %v1062 = vsub.f32 %v1058, %v1061
        %v1063 = vmul.f32 %v1062, 1.442695
        %v1064 = vpow.pop %v1063
        %v1065 = vsel %vm387, %v1064, 0.0
        %1066 = vadd.xlane.f32.xlu0 %v1065
        %v1067 = vpop.xlane.xlu0 %1066
        %v1068 = vrcp.pop %v1067
        %v1069 = vmul.f32 %v1064, %v1068
        %v1070 = vpack.c.bf16 %v1069, %v1069
        %1071 = vrot.lane.b32.xlu0 %v895, 48
        %v1072 = vpop.permute.xlu0 %1071
        %v1074 = vsel %vm387, %v1070, 0
        %v1077 = vsel %vm405, %v1072, 0
        %1079 = vmatprep.subr.bf16.mxu0 0
        %1080 = vmatpush1.bf16.msra.mxu0 %v1077
        %1081 = vmatprep.subr.bf16.mxu0 0
        %1082 = vmatpush1.bf16.msra.mxu0 0
        %1083 = vmatprep.subr.bf16.mxu0 0
        %1084 = vmatpush1.bf16.msra.mxu0 0
        %1085 = vmatprep.subr.bf16.mxu0 0
        %1086 = vmatpush1.bf16.msra.mxu0 0
        %1087 = vmatprep.subr.bf16.mxu0 0
        %1088 = vmatpush1.bf16.msra.mxu0 0
        %1089 = vmatprep.subr.bf16.mxu0 0
        %1090 = vmatpush1.bf16.msra.mxu0 0
        %1091 = vmatprep.subr.bf16.mxu0 0
        %1092 = vmatpush1.bf16.msra.mxu0 0
        %1093 = vmatprep.subr.bf16.mxu0 0
        %1094 = vmatpush1.bf16.msra.mxu0 0
        %1095 = vmatprep.subr.bf16.mxu0 0
        %1096 = vmatpush1.bf16.msra.mxu0 0
        %1097 = vmatprep.subr.bf16.mxu0 0
        %1098 = vmatpush1.bf16.msra.mxu0 0
        %1099 = vmatprep.subr.bf16.mxu0 0
        %1100 = vmatpush1.bf16.msra.mxu0 0
        %1101 = vmatprep.subr.bf16.mxu0 0
        %1102 = vmatpush1.bf16.msra.mxu0 0
        %1103 = vmatprep.subr.bf16.mxu0 0
        %1104 = vmatpush1.bf16.msra.mxu0 0
        %1105 = vmatprep.subr.bf16.mxu0 0
        %1106 = vmatpush1.bf16.msra.mxu0 0
        %1107 = vmatprep.subr.bf16.mxu0 0
        %1108 = vmatpush1.bf16.msra.mxu0 0
        %1109 = vmatprep.subr.bf16.mxu0 0
        %1110 = vmatpush1.bf16.msra.mxu0 0
        %1111 = vmatprep.mubr.bf16.mxu0 0
        %1112 = vmatmul.mubr.bf16.gmra.mrb[0].mxu0 %v1074
        %v1113 = vpop.f32.mrb[0].mxu0
        %v1114 = vadd.f32 0.0, %v1113
        %v1115 = vpop.f32.mrb[0].mxu0
        %v1116 = vpop.f32.mrb[0].mxu0
        %v1117 = vpop.f32.mrb[0].mxu0
        %1118 = vdwg.mxu0
        %1120 = vrot.lane.b32.xlu0 %v1114, 16
        %v1121 = vpop.permute.xlu0 %1120
        %v1123 = vsel %vm332, %v1002, %v1121
        %v1124 = vpack.c.bf16 %v1123, %v1123
        %v1125 = vld [vmem:[%s4 + $0xb] sm:$0x1]
        %v1126 = vlaneseq
        %v1127 = vshrl.u32 %v1126, 7
        %v1128 = vsub.s32 0, %v1127
        %v1129 = vrot.slane %v1125, %v1128
        %1130 = vrot.lane.b32.xlu0 %v848, 32
        %v1131 = vpop.permute.xlu0 %1130
        %1132 = vrot.lane.b32.xlu0 %v849, 32
        %v1133 = vpop.permute.xlu0 %1132
        %v1137 = vsel %vm238, %v1124, 0
        %1139 = vmatprep.subr.bf16.mxu0 0
        %1140 = vmatpush1.bf16.msra.mxu0 %v1131
        %1141 = vmatprep.subr.bf16.mxu0 0
        %1142 = vmatpush1.bf16.msra.mxu0 %v1133
        %1143 = vmatprep.subr.bf16.mxu0 0
        %1144 = vmatpush1.bf16.msra.mxu0 0
        %1145 = vmatprep.subr.bf16.mxu0 0
        %1146 = vmatpush1.bf16.msra.mxu0 0
        %1147 = vmatprep.subr.bf16.mxu0 0
        %1148 = vmatpush1.bf16.msra.mxu0 0
        %1149 = vmatprep.subr.bf16.mxu0 0
        %1150 = vmatpush1.bf16.msra.mxu0 0
        %1151 = vmatprep.subr.bf16.mxu0 0
        %1152 = vmatpush1.bf16.msra.mxu0 0
        %1153 = vmatprep.subr.bf16.mxu0 0
        %1154 = vmatpush1.bf16.msra.mxu0 0
        %1155 = vmatprep.subr.bf16.mxu0 0
        %1156 = vmatpush1.bf16.msra.mxu0 0
        %1157 = vmatprep.subr.bf16.mxu0 0
        %1158 = vmatpush1.bf16.msra.mxu0 0
        %1159 = vmatprep.subr.bf16.mxu0 0
        %1160 = vmatpush1.bf16.msra.mxu0 0
        %1161 = vmatprep.subr.bf16.mxu0 0
        %1162 = vmatpush1.bf16.msra.mxu0 0
        %1163 = vmatprep.subr.bf16.mxu0 0
        %1164 = vmatpush1.bf16.msra.mxu0 0
        %1165 = vmatprep.subr.bf16.mxu0 0
        %1166 = vmatpush1.bf16.msra.mxu0 0
        %1167 = vmatprep.subr.bf16.mxu0 0
        %1168 = vmatpush1.bf16.msra.mxu0 0
        %1169 = vmatprep.subr.bf16.mxu0 0
        %1170 = vmatpush1.bf16.msra.mxu0 0
        %1171 = vmatprep.mubr.bf16.mxu0 0
        %1172 = vmatmul.mubr.bf16.gmra.mrb[0].mxu0 %v1137
        %v1173 = vpop.f32.mrb[0].mxu0
        %v1174 = vadd.f32 %v1129, %v1173
        %v1175 = vpop.f32.mrb[0].mxu0
        %v1176 = vpop.f32.mrb[0].mxu0
        %v1177 = vpop.f32.mrb[0].mxu0
        %1178 = vdwg.mxu0
        %v1179 = vadd.f32 %v1174, %v828
        %v1180 = vld [vmem:[%s4 + $0xc] sm:$0x1]
        %v1181 = vld [vmem:[%s4 + $0xd] sm:$0x1]
        %v1182 = vsel %vm238, %v1179, 0.0
        %1183 = vadd.xlane.f32.xlu0 %v1182
        %v1184 = vpop.xlane.xlu0 %1183
        %v1185 = vmul.f32 %v1184, %v242
        %v1186 = vsub.f32 %v1179, %v1185
        %v1187 = vmul.f32 %v1186, %v1186
        %v1188 = vsel %vm238, %v1187, 0.0
        %1189 = vadd.xlane.f32.xlu0 %v1188
        %v1190 = vpop.xlane.xlu0 %1189
        %v1191 = vmul.f32 %v1190, %v242
        %v1192 = vadd.f32 %v1191, 1e-12
        %v1193 = vrsqrt.pop %v1192
        %v1194 = vmul.f32 %v1186, %v1193
        %v1195 = vlaneseq
        %v1196 = vshrl.u32 %v1195, 7
        %v1197 = vsub.s32 0, %v1196
        %v1198 = vrot.slane %v1180, %v1197
        %v1199 = vmul.f32 %v1194, %v1198
        %v1200 = vlaneseq
        %v1201 = vshrl.u32 %v1200, 7
        %v1202 = vsub.s32 0, %v1201
        %v1203 = vrot.slane %v1181, %v1202
        %v1204 = vadd.f32 %v1199, %v1203
        %v1205 = vpack.c.bf16 %v1204, %v1204
        %v1206 = vld [vmem:[%s830 + $0x4] sm:$0xf]
        %v1207 = vld [vmem:[%s830 + $0xc] sm:$0xf]
        %v1208 = vld [vmem:[%s830 + $0x14] sm:$0xf]
        %v1209 = vld [vmem:[%s830 + $0x1c] sm:$0xf]
        %v1210 = vld [vmem:[%s4 + $0xe] sm:$0x1]
        %v1211 = vlaneseq
        %v1212 = vshrl.u32 %v1211, 7
        %v1213 = vsub.s32 0, %v1212
        %v1214 = vrot.slane %v1210, %v1213
        %v1219 = vunpack.c.l.b16 %v1206
        %v1220 = vunpack.c.l.b16 %v1207
        %v1221 = vunpack.c.l.b16 %v1208
        %v1222 = vunpack.c.l.b16 %v1209
        %v1223 = vpack.c.b16 %v1220, %v1219
        %v1224 = vpack.c.b16 %v1222, %v1221
        %v1228 = vsel %vm238, %v1205, 0
        %1230 = vmatprep.subr.bf16.mxu0 0
        %1231 = vmatpush1.bf16.msra.mxu0 %v1223
        %1232 = vmatprep.subr.bf16.mxu0 0
        %1233 = vmatpush1.bf16.msra.mxu0 %v1224
        %1234 = vmatprep.subr.bf16.mxu0 0
        %1235 = vmatpush1.bf16.msra.mxu0 0
        %1236 = vmatprep.subr.bf16.mxu0 0
        %1237 = vmatpush1.bf16.msra.mxu0 0
        %1238 = vmatprep.subr.bf16.mxu0 0
        %1239 = vmatpush1.bf16.msra.mxu0 0
        %1240 = vmatprep.subr.bf16.mxu0 0
        %1241 = vmatpush1.bf16.msra.mxu0 0
        %1242 = vmatprep.subr.bf16.mxu0 0
        %1243 = vmatpush1.bf16.msra.mxu0 0
        %1244 = vmatprep.subr.bf16.mxu0 0
        %1245 = vmatpush1.bf16.msra.mxu0 0
        %1246 = vmatprep.subr.bf16.mxu0 0
        %1247 = vmatpush1.bf16.msra.mxu0 0
        %1248 = vmatprep.subr.bf16.mxu0 0
        %1249 = vmatpush1.bf16.msra.mxu0 0
        %1250 = vmatprep.subr.bf16.mxu0 0
        %1251 = vmatpush1.bf16.msra.mxu0 0
        %1252 = vmatprep.subr.bf16.mxu0 0
        %1253 = vmatpush1.bf16.msra.mxu0 0
        %1254 = vmatprep.subr.bf16.mxu0 0
        %1255 = vmatpush1.bf16.msra.mxu0 0
        %1256 = vmatprep.subr.bf16.mxu0 0
        %1257 = vmatpush1.bf16.msra.mxu0 0
        %1258 = vmatprep.subr.bf16.mxu0 0
        %1259 = vmatpush1.bf16.msra.mxu0 0
        %1260 = vmatprep.subr.bf16.mxu0 0
        %1261 = vmatpush1.bf16.msra.mxu0 0
        %1262 = vmatprep.mubr.bf16.mxu0 0
        %1263 = vmatmul.mubr.bf16.gmra.mrb[0].mxu0 %v1228
        %v1264 = vpop.f32.mrb[0].mxu0
        %v1265 = vadd.f32 %v1214, %v1264
        %v1266 = vpop.f32.mrb[0].mxu0
        %v1267 = vpop.f32.mrb[0].mxu0
        %v1268 = vpop.f32.mrb[0].mxu0
        %1269 = vdwg.mxu0
        %v1270 = vmul.f32 %v1265, %v1265
        %v1271 = vmul.f32 %v1265, %v1270
        %v1272 = vmul.f32 %v1271, 0.044715
        %v1273 = vadd.f32 %v1265, %v1272
        %v1274 = vmul.f32 %v1273, 0.7978846
        %v1275 = vtanh.pop %v1274
        %v1276 = vadd.f32 %v1275, 1.0
        %v1277 = vmul.f32 %v1276, 0.5
        %v1278 = vmul.f32 %v1265, %v1277
        %v1279 = vpack.c.bf16 %v1278, %v1278
        %s1280 = scalar_lea.vmem %s3, 32
        %v1281 = vld [vmem:[%s1280] sm:$0xf]
        %v1282 = vld [vmem:[%s1280 + $0x4] sm:$0xf]
        %v1283 = vld [vmem:[%s1280 + $0x8] sm:$0xf]
        %v1284 = vld [vmem:[%s1280 + $0xc] sm:$0xf]
        %v1285 = vld [vmem:[%s1280 + $0x10] sm:$0xf]
        %v1286 = vld [vmem:[%s1280 + $0x14] sm:$0xf]
        %v1287 = vld [vmem:[%s1280 + $0x18] sm:$0xf]
        %v1288 = vld [vmem:[%s1280 + $0x1c] sm:$0xf]
        %v1289 = vld [vmem:[%s4 + $0xf] sm:$0x1]
        %v1290 = vlaneseq
        %v1291 = vshrl.u32 %v1290, 7
        %v1292 = vsub.s32 0, %v1291
        %v1293 = vrot.slane %v1289, %v1292
        %v1302 = vunpack.c.l.b16 %v1281
        %v1303 = vunpack.c.l.b16 %v1282
        %v1304 = vunpack.c.l.b16 %v1283
        %v1305 = vunpack.c.l.b16 %v1284
        %v1306 = vunpack.c.l.b16 %v1285
        %v1307 = vunpack.c.l.b16 %v1286
        %v1308 = vunpack.c.l.b16 %v1287
        %v1309 = vunpack.c.l.b16 %v1288
        %v1310 = vpack.c.b16 %v1303, %v1302
        %v1311 = vpack.c.b16 %v1305, %v1304
        %v1312 = vpack.c.b16 %v1307, %v1306
        %v1313 = vpack.c.b16 %v1309, %v1308
        %v1319 = vsel %vm759, %v1279, 0
        %1321 = vmatprep.subr.bf16.mxu0 0
        %1322 = vmatpush1.bf16.msra.mxu0 %v1310
        %1323 = vmatprep.subr.bf16.mxu0 0
        %1324 = vmatpush1.bf16.msra.mxu0 %v1311
        %1325 = vmatprep.subr.bf16.mxu0 0
        %1326 = vmatpush1.bf16.msra.mxu0 %v1312
        %1327 = vmatprep.subr.bf16.mxu0 0
        %1328 = vmatpush1.bf16.msra.mxu0 %v1313
        %1329 = vmatprep.subr.bf16.mxu0 0
        %1330 = vmatpush1.bf16.msra.mxu0 0
        %1331 = vmatprep.subr.bf16.mxu0 0
        %1332 = vmatpush1.bf16.msra.mxu0 0
        %1333 = vmatprep.subr.bf16.mxu0 0
        %1334 = vmatpush1.bf16.msra.mxu0 0
        %1335 = vmatprep.subr.bf16.mxu0 0
        %1336 = vmatpush1.bf16.msra.mxu0 0
        %1337 = vmatprep.subr.bf16.mxu0 0
        %1338 = vmatpush1.bf16.msra.mxu0 0
        %1339 = vmatprep.subr.bf16.mxu0 0
        %1340 = vmatpush1.bf16.msra.mxu0 0
        %1341 = vmatprep.subr.bf16.mxu0 0
        %1342 = vmatpush1.bf16.msra.mxu0 0
        %1343 = vmatprep.subr.bf16.mxu0 0
        %1344 = vmatpush1.bf16.msra.mxu0 0
        %1345 = vmatprep.subr.bf16.mxu0 0
        %1346 = vmatpush1.bf16.msra.mxu0 0
        %1347 = vmatprep.subr.bf16.mxu0 0
        %1348 = vmatpush1.bf16.msra.mxu0 0
        %1349 = vmatprep.subr.bf16.mxu0 0
        %1350 = vmatpush1.bf16.msra.mxu0 0
        %1351 = vmatprep.subr.bf16.mxu0 0
        %1352 = vmatpush1.bf16.msra.mxu0 0
        %1353 = vmatprep.mubr.bf16.mxu0 0
        %1354 = vmatmul.mubr.bf16.gmra.mrb[0].mxu0 %v1319
        %v1355 = vpop.f32.mrb[0].mxu0
        %v1356 = vadd.f32 %v1293, %v1355
        %v1357 = vpop.f32.mrb[0].mxu0
        %v1358 = vpop.f32.mrb[0].mxu0
        %v1359 = vpop.f32.mrb[0].mxu0
        %1360 = vdwg.mxu0
        %v1361 = vadd.f32 %v1356, %v1204
        %v1362 = vld [vmem:[%s4 + $0x10] sm:$0x1]
        %v1363 = vld [vmem:[%s4 + $0x11] sm:$0x1]
        %v1364 = vsel %vm238, %v1361, 0.0
        %1365 = vadd.xlane.f32.xlu0 %v1364
        %v1366 = vpop.xlane.xlu0 %1365
        %v1367 = vmul.f32 %v1366, %v242
        %v1368 = vsub.f32 %v1361, %v1367
        %v1369 = vmul.f32 %v1368, %v1368
        %v1370 = vsel %vm238, %v1369, 0.0
        %1371 = vadd.xlane.f32.xlu0 %v1370
        %v1372 = vpop.xlane.xlu0 %1371
        %v1373 = vmul.f32 %v1372, %v242
        %v1374 = vadd.f32 %v1373, 1e-12
        %v1375 = vrsqrt.pop %v1374
        %v1376 = vmul.f32 %v1368, %v1375
        %v1377 = vlaneseq
        %v1378 = vshrl.u32 %v1377, 7
        %v1379 = vsub.s32 0, %v1378
        %v1380 = vrot.slane %v1362, %v1379
        %v1381 = vmul.f32 %v1376, %v1380
        %v1382 = vlaneseq
        %v1383 = vshrl.u32 %v1382, 7
        %v1384 = vsub.s32 0, %v1383
        %v1385 = vrot.slane %v1363, %v1384
        %v1386 = vadd.f32 %v1381, %v1385
        %v1387 = vlaneseq
        %v1388 = vshrl.u32 %v1387, 7
        %vm1389 = vcmp.ge.s32.totalorder %v1388, 1
        %vm1390 = vcmp.le.s32.totalorder %v1388, 6
        %vm1391 = vmand %vm1389, %vm1390
        %v1392 = vsel %vm1391, %v1386, 0.0
        %v1393 = vsel %vm238, %v1392, 0.0
        %v1394 = vrot.slane %v1393, 4
        %v1395 = vadd.f32 %v1393, %v1394
        %v1396 = vrot.slane %v1395, 2
        %v1397 = vadd.f32 %v1395, %v1396
        %v1398 = vrot.slane %v1397, 1
        %v1399 = vadd.f32 %v1397, %v1398
        %v1400 = vmul.f32 %v1399, %v1399
        %v1401 = vsel %vm238, %v1400, 0.0
        %1402 = vadd.xlane.f32.xlu0 %v1401
        %v1403 = vpop.xlane.xlu0 %1402
        %v1404 = vmax.f32 %v1403, 1e-24
        %v1405 = vrsqrt.pop %v1404
        %v1406 = vmul.f32 %v1399, %v1405
        %vm1407 = vcmask 253952
        %1408 = vst.msk [vmem:[%s225] sm:$0x1] %vm1407, %v1406
        %s1409 = sand.u32 %s142, 1
        %s1410 = scalar_lea.sflag [#allocation3], %s1409
        %s1411 = sand.u32 %s142, 1
        %s1412 = scalar_lea.vmem [#allocation2], %s1411
        // Predicated region
        $region41: #{labse_encode.1} parent=39 // pred_check
          %p1413 = pneg %p152
        $region42: #{labse_encode.1} parent=39 // pred_check_branch
          %1415 = sbr.rel (%p1413) target = $region44
        $region43: #{labse_encode.1} parent=39 // pred_region
          %s1417 = ssub.s32 16, 16
          %1418 = vsyncadd %s1410, %s1417
          %s1419 = smul.addr %s19, 16
          %s1420 = scalar_lea.hbm %s5, %s1419
          %s1422 = sshll.u32 %s1412, 4
          %s1423 = int_to_ptr.vmem [resolvable:$true] %s1422
          %1425 = dma.vmem_to_hbm [thread:$0]  %s1423, 16, %s1420, %s1410
        $region44: #{labse_encode.1} parent=39 // pred_fallthru
          _
      $region40: #{labse_encode.1} parent=5 // pred_fallthru
        _
      %p1426 = scmp.le.s32.totalorder 2, %s14
      // Predicated region
      $region45: #{labse_encode.1} parent=5 // pred_check
        %p1427 = pneg %p1426
      $region46: #{labse_encode.1} parent=5 // pred_check_branch
        %1429 = sbr.rel (%p1427) target = $region48
      $region47: #{labse_encode.1} parent=5 // pred_region
        %s1430 = ssub.s32 %s14, 2
        // Predicated region
        $region49: #{labse_encode.1} parent=47 // pred_check
          %p1431 = pneg %p158
        $region50: #{labse_encode.1} parent=47 // pred_check_branch
          %1433 = sbr.rel (%p1431) target = $region52
        $region51: #{labse_encode.1} parent=47 // pred_region
          %s1434 = sand.u32 %s143, 1
          %s1435 = scalar_lea.sflag [#allocation3], %s1434
          %s1436 = sand.u32 %s143, 1
          %s1437 = scalar_lea.vmem [#allocation2], %s1436
          %1438 = dma.done %s1435, 16
        $region52: #{labse_encode.1} parent=47 // pred_fallthru
          _
      $region48: #{labse_encode.1} parent=5 // pred_fallthru
        _
    $region6: #{labse_encode.1} parent=1 // loop_footer
      %s18 = sadd.s32 1, %s14
    $region7: #{labse_encode.1} parent=1 // loop_footer_branch
      %13 = sbr.rel target = $region3
    $region8: #{labse_encode.1} parent=1 // loop_exit
      _
    %1439 = vsyncpa [#allocation3], 1
    %s1440 = scalar_lea.sflag [#allocation3], 1
    %1441 = vsyncpa %s1440, 1

</llo_original>
